<compile_context>
chip_gen: v6e
topology: v6e:2x2x1
jax: 0.10.0
libtpu: 0.0.40
codegen_flags: <defaults>
</compile_context>

<pallas_src>
import functools

import jax
import jax.numpy as jnp
from jax.experimental import pallas as pl
from jax.experimental.pallas import tpu as pltpu


# ------------------------------ tiling helpers ------------------------------ #

def _round_up(x, m):
    return (x + m - 1) // m * m


def _pick_tile_h(Ho, Wo_p, target_rows=256):
    """Largest H tile dividing Ho with TH*Wo_p <= target_rows (acc-size cap)."""
    best = 1
    for th in range(1, Ho + 1):
        if Ho % th == 0 and th * Wo_p <= target_rows:
            best = th
    return best


# ------------------------------- Pallas kernel ------------------------------ #

def _make_kernel(*, KH, stride, TH, Wo_p, n_ph, res_mode, apply_relu):
    """Fused direct conv (KW folded into K, kh-phase decomposed stride)
    + folded-BN bias [+ residual: identity add or fused 1x1 conv] [+ ReLU].

    Ref order: slab_0..slab_{n_ph-1}, w_taps, bias, [residual, [res_w]], out.
    """
    M = TH * Wo_p

    def kernel(*refs):
        slab_refs = refs[:n_ph]
        w_ref = refs[n_ph]
        b_ref = refs[n_ph + 1]
        pos = n_ph + 2
        r_ref = rw_ref = None
        if res_mode == "identity":
            r_ref = refs[pos]
            pos += 1
        elif res_mode == "conv":
            r_ref, rw_ref = refs[pos], refs[pos + 1]
            pos += 2
        o_ref = refs[pos]

        # KH back-to-back MXU matmuls with K = Kp = KW*Cin (padded to 128).
        # Each tap's activation window is a static, 8-aligned row slice of the
        # flattened slab -- no reshapes / relayouts between dots.
        acc = None
        for kh in range(KH):
            patch = slab_refs[kh % stride][0, pl.ds((kh // stride) * Wo_p, M), :]
            d = jnp.dot(patch, w_ref[kh], preferred_element_type=jnp.float32)
            acc = d if acc is None else acc + d
        if res_mode == "conv":        # fused 1x1 downsample shortcut (BN in bias)
            acc = acc + jnp.dot(r_ref[0], rw_ref[...],
                                preferred_element_type=jnp.float32)

        acc = acc + b_ref[...]                       # folded BN bias(es), f32
        if res_mode == "identity":
            acc = acc + r_ref[0].astype(jnp.float32)
        if apply_relu:
            acc = jnp.maximum(acc, 0.0)
        o_ref[0] = acc.astype(o_ref.dtype)

    return kernel


def conv_block(slabs, w_taps, bias, *, KH, stride, NB, TH, Wo_p, Cout_p,
               residual=None, res_w=None, apply_relu=True,
               out_dtype=jnp.bfloat16):
    """One fused pallas_call: conv + BN bias (+shortcut/residual) (+ReLU)."""
    n_ph = len(slabs)
    THh_M, Kp = slabs[0].shape[1], slabs[0].shape[2]
    M = TH * Wo_p
    Ct = 128                       # lane-dense output tile (Cout_p % 128 == 0)
    nc = Cout_p // Ct
    grid = (NB, nc)                # batch/H-tile axis first (megacore split)

    in_specs, inputs = [], []
    for sl in slabs:               # per-tile slab: re-DMAed only when b changes
        in_specs.append(pl.BlockSpec((1, THh_M, Kp), lambda b, c: (b, 0, 0)))
        inputs.append(sl)
    in_specs.append(pl.BlockSpec((KH, Kp, Ct), lambda b, c: (0, 0, c)))
    inputs.append(w_taps)
    in_specs.append(pl.BlockSpec((1, Ct), lambda b, c: (0, c)))
    inputs.append(bias)

    res_mode = None
    flops = 2.0 * NB * M * Kp * Cout_p * KH
    if residual is not None:
        Cr = residual.shape[-1]
        if res_w is not None:                         # fused 1x1 downsample
            res_mode = "conv"
            in_specs.append(pl.BlockSpec((1, M, Cr), lambda b, c: (b, 0, 0)))
            inputs.append(residual)
            in_specs.append(pl.BlockSpec((Cr, Ct), lambda b, c: (0, c)))
            inputs.append(res_w)
            flops += 2.0 * NB * M * Cr * Cout_p
        else:                                         # identity shortcut
            res_mode = "identity"
            in_specs.append(pl.BlockSpec((1, M, Ct), lambda b, c: (b, 0, c)))
            inputs.append(residual)

    kernel = _make_kernel(KH=KH, stride=stride, TH=TH, Wo_p=Wo_p,
                          n_ph=n_ph, res_mode=res_mode, apply_relu=apply_relu)

    out_bytes = NB * M * Cout_p * jnp.dtype(out_dtype).itemsize
    in_bytes = sum(int(a.size) * a.dtype.itemsize for a in inputs)
    cost = pl.CostEstimate(flops=int(flops), transcendentals=0,
                           bytes_accessed=int(in_bytes + out_bytes))

    return pl.pallas_call(
        kernel,
        grid=grid,
        in_specs=in_specs,
        out_specs=pl.BlockSpec((1, M, Ct), lambda b, c: (b, 0, c)),
        out_shape=jax.ShapeDtypeStruct((NB, M, Cout_p), out_dtype),
        compiler_params=pltpu.CompilerParams(
            dimension_semantics=("parallel", "parallel")),
        cost_estimate=cost,
    )(*inputs)


# ------------------------------ JAX-side glue ------------------------------- #

def _build_slabs(x, KH, KW, stride, pad, Ho, Wo, Wo_p, TH, nh):
    """Per-kh-phase, KW-folded, H-tiled, row-flattened conv input slabs.

    tiled[ph][n*nh + i, r*Wo_p + wo, kw*Cin + c]
        == x_pad[n, stride*(i*TH + r) + ph, stride*wo + kw, c]
    so tap kh (phase kh%stride, dh = kh//stride) is the contiguous, 8-aligned
    row slice [dh*Wo_p, dh*Wo_p + TH*Wo_p) of the tile.
    """
    N, H, W, C = x.shape
    s = stride
    xp = jnp.pad(x, ((0, 0), (pad, pad), (pad, pad), (0, 0))) if pad else x
    Hn = Ho + (KH - 1) // s                 # rows needed per phase
    THh = TH + (KH - 1) // s                # rows per H tile (incl. halo)
    Kraw = KW * C
    Kp = _round_up(Kraw, 128)

    tiled, untiled = [], []
    for ph in range(s):
        rows = xp[:, ph::s, :, :]
        if rows.shape[1] < Hn:              # stride-2 tail row (never read)
            rows = jnp.pad(rows, ((0, 0), (0, Hn - rows.shape[1]), (0, 0), (0, 0)))
        rows = rows[:, :Hn]
        wins = [rows[:, :, kw:kw + s * (Wo - 1) + 1:s, :] for kw in range(KW)]
        slab = jnp.concatenate(wins, axis=-1)                        # (N,Hn,Wo,KW*C)
        slab = jnp.pad(slab, ((0, 0), (0, 0), (0, Wo_p - Wo), (0, Kp - Kraw)))
        untiled.append(slab)
        t = jnp.stack([slab[:, i * TH:i * TH + THh] for i in range(nh)], axis=1)
        tiled.append(t.reshape(N * nh, THh * Wo_p, Kp))
    return tiled, untiled, Kp


def _prep_residual(r, Wo_p, Cp, NB, TH):
    """(N, Ho, Wr, Cr) -> (N*nh, TH*Wo_p, Cp), zero-padding W and channels."""
    _, _, Wr, Cr = r.shape
    r = jnp.pad(r, ((0, 0), (0, 0), (0, Wo_p - Wr), (0, Cp - Cr)))
    return r.reshape(NB, TH * Wo_p, Cp)


def _fold_bn(gamma, beta, mean, var, eps=1e-5):
    scale = gamma / jnp.sqrt(var + eps)
    return scale, beta - mean * scale


def _fold_conv_weight(w_oihw, scale, Kp, Cout_p):
    """torch (Cout,Cin,KH,KW) -> (KH, Kp, Cout_p) bf16, BN scale folded.
    K layout is kw-major-then-cin, matching the slab channel layout."""
    Cout, Cin, KH, KW = w_oihw.shape
    w = w_oihw * scale.reshape(Cout, 1, 1, 1)
    w = jnp.transpose(w, (2, 3, 1, 0)).reshape(KH, KW * Cin, Cout)
    w = jnp.pad(w, ((0, 0), (0, Kp - KW * Cin), (0, Cout_p - Cout)))
    return w.astype(jnp.bfloat16)


def _pad_bias(b, Cout_p):
    return jnp.pad(b, (0, Cout_p - b.shape[0])).reshape(1, Cout_p).astype(jnp.float32)


@functools.partial(jax.jit, static_argnames=("stride",))
def basic_block_forward(x_nchw, params, *, stride):
    """BasicBlock: relu(bn2(conv2(relu(bn1(conv1(x))))) + shortcut(x))."""
    x = jnp.transpose(x_nchw, (0, 2, 3, 1)).astype(jnp.bfloat16)     # NCHW->NHWC
    N, H, W, Cin = x.shape
    Cout = params["conv1_w"].shape[0]
    Ho = (H + 2 - 3) // stride + 1
    Wo = (W + 2 - 3) // stride + 1
    Wo_p = _round_up(Wo, 8)
    Cout_p = _round_up(Cout, 128)
    TH = _pick_tile_h(Ho, Wo_p)
    nh = Ho // TH
    NB = N * nh

    # --- conv1 (3x3, stride, pad=1) + bn1 + relu: one fused kernel ---------- #
    s1, b1 = _fold_bn(params["bn1_gamma"], params["bn1_beta"],
                      params["bn1_mean"], params["bn1_var"])
    slabs1, untiled1, Kp1 = _build_slabs(x, 3, 3, stride, 1, Ho, Wo, Wo_p, TH, nh)
    w1 = _fold_conv_weight(params["conv1_w"], s1, Kp1, Cout_p)
    y1 = conv_block(slabs1, w1, _pad_bias(b1, Cout_p),
                    KH=3, stride=stride, NB=NB, TH=TH, Wo_p=Wo_p, Cout_p=Cout_p,
                    apply_relu=True, out_dtype=jnp.bfloat16)
    # back to spatial (real cols/channels only) for conv2's slab build
    y1_sp = y1.reshape(N, Ho, Wo_p, Cout_p)[:, :, :Wo, :Cout]

    # --- conv2 (3x3, s=1, pad=1) + bn2 + shortcut + add + relu: fused ------- #
    s2, b2 = _fold_bn(params["bn2_gamma"], params["bn2_beta"],
                      params["bn2_mean"], params["bn2_var"])
    slabs2, _, Kp2 = _build_slabs(y1_sp, 3, 3, 1, 1, Ho, Wo, Wo_p, TH, nh)
    w2 = _fold_conv_weight(params["conv2_w"], s2, Kp2, Cout_p)

    if stride != 1 or Cin != Cout:
        ss, bs = _fold_bn(params["sc_gamma"], params["sc_beta"],
                          params["sc_mean"], params["sc_var"])
        Csc_p = _round_up(Cin, 128)
        wsc = params["sc_w"][:, :, 0, 0] * ss.reshape(Cout, 1)       # (Cout, Cin)
        wsc = jnp.pad(wsc.T, ((0, Csc_p - Cin),
                              (0, Cout_p - Cout))).astype(jnp.bfloat16)
        if stride == 1:
            x_sc = x                                                 # (N,Ho,Wo,Cin)
        else:
            # Reuse conv1's phase-1 slab: x[n,s*ho,s*wo,c] == x_pad[n,s*ho+1,s*wo+1,c]
            # == untiled1[1][n, ho, wo, 1*Cin + c]  (kw=1 window, already W-padded).
            x_sc = untiled1[1][:, :Ho, :, Cin:2 * Cin]               # (N,Ho,Wo_p,Cin)
        res = _prep_residual(x_sc, Wo_p, Csc_p, NB, TH)
        out = conv_block(slabs2, w2, _pad_bias(b2 + bs, Cout_p),
                         KH=3, stride=1, NB=NB, TH=TH, Wo_p=Wo_p, Cout_p=Cout_p,
                         residual=res, res_w=wsc,
                         apply_relu=True, out_dtype=jnp.bfloat16)
    else:
        res = _prep_residual(x, Wo_p, Cout_p, NB, TH)                # identity
        out = conv_block(slabs2, w2, _pad_bias(b2, Cout_p),
                         KH=3, stride=1, NB=NB, TH=TH, Wo_p=Wo_p, Cout_p=Cout_p,
                         residual=res,
                         apply_relu=True, out_dtype=jnp.bfloat16)

    out = out.reshape(N, Ho, Wo_p, Cout_p)[:, :, :Wo, :Cout]         # strip padding
    out = jnp.transpose(out, (0, 3, 1, 2))                           # NHWC->NCHW, bf16
    return out.astype(jnp.float32)


# ------------------------------ reference & init ---------------------------- #

def _reference_forward(x_nchw, params, stride):
    """Pure-JAX f32 reference (lax conv) for correctness checking."""
    x = jnp.transpose(x_nchw, (0, 2, 3, 1)).astype(jnp.float32)

    def conv(inp, w, s, pad):
        rhs = jnp.transpose(w, (2, 3, 1, 0))                         # HWIO
        return jax.lax.conv_general_dilated(
            inp, rhs, (s, s), [(pad, pad), (pad, pad)],
            dimension_numbers=("NHWC", "HWIO", "NHWC"))

    def bn(y, g, b, m, v, eps=1e-5):
        return (y - m) / jnp.sqrt(v + eps) * g + b

    y = jax.nn.relu(bn(conv(x, params["conv1_w"], stride, 1),
                       params["bn1_gamma"], params["bn1_beta"],
                       params["bn1_mean"], params["bn1_var"]))
    y = bn(conv(y, params["conv2_w"], 1, 1),
           params["bn2_gamma"], params["bn2_beta"],
           params["bn2_mean"], params["bn2_var"])
    Cin = x.shape[-1]
    Cout = params["conv1_w"].shape[0]
    if stride != 1 or Cin != Cout:
        sc = bn(conv(x, params["sc_w"], stride, 0),
                params["sc_gamma"], params["sc_beta"],
                params["sc_mean"], params["sc_var"])
    else:
        sc = x
    out = jax.nn.relu(y + sc)
    return jnp.transpose(out, (0, 3, 1, 2))


def init_params(key, in_planes, out_planes, stride):
    ks = jax.random.split(key, 8)

    def bn_params(k, c):
        k1, k2, k3, k4 = jax.random.split(k, 4)
        return (1.0 + 0.1 * jax.random.normal(k1, (c,), jnp.float32),   # gamma
                0.1 * jax.random.normal(k2, (c,), jnp.float32),         # beta
                0.05 * jax.random.normal(k3, (c,), jnp.float32),        # mean
                1.0 + 0.1 * jnp.abs(jax.random.normal(k4, (c,), jnp.float32)))

    g1, b1, m1, v1 = bn_params(ks[2], out_planes)
    g2, b2, m2, v2 = bn_params(ks[3], out_planes)
    params = {
        "conv1_w": 0.1 * jax.random.normal(
            ks[0], (out_planes, in_planes, 3, 3), jnp.float32),
        "conv2_w": 0.1 * jax.random.normal(
            ks[1], (out_planes, out_planes, 3, 3), jnp.float32),
        "bn1_gamma": g1, "bn1_beta": b1, "bn1_mean": m1, "bn1_var": v1,
        "bn2_gamma": g2, "bn2_beta": b2, "bn2_mean": m2, "bn2_var": v2,
    }
    if stride != 1 or in_planes != out_planes:
        gs, bs, ms, vs = bn_params(ks[5], out_planes)
        params["sc_w"] = 0.1 * jax.random.normal(
            ks[4], (out_planes, in_planes, 1, 1), jnp.float32)
        params["sc_gamma"] = gs
        params["sc_beta"] = bs
        params["sc_mean"] = ms
        params["sc_var"] = vs
    return params


if __name__ == "__main__":
    key = jax.random.PRNGKey(0)

    configs = [
        # (N, Cin, H, W, Cout, stride)
        (2, 4, 16, 16, 8, 2),   # downsample shortcut (1x1 conv + BN), fused
        (2, 8, 8, 8, 8, 1),     # identity shortcut
    ]
    for idx, (N, Cin, H, W, Cout, stride) in enumerate(configs):
        kx, kp, key = jax.random.split(key, 3)
        x = jax.random.normal(kx, (N, Cin, H, W), jnp.float32)
        params = init_params(kp, Cin, Cout, stride)

        out = jax.block_until_ready(basic_block_forward(x, params, stride=stride))

        Ho = (H + 2 - 3) // stride + 1
        Wo = (W + 2 - 3) // stride + 1
        assert out.shape == (N, Cout, Ho, Wo), out.shape
        assert bool(jnp.all(out >= 0.0))                 # final ReLU
        assert bool(jnp.all(jnp.isfinite(out)))

        ref = _reference_forward(x, params, stride)
        rel = float(jnp.max(jnp.abs(out - ref) / (jnp.abs(ref) + 1.0)))
        assert rel < 5e-2, f"config {idx}: max normalized err = {rel}"   # bf16 path

    print("KERNEL_OK")
</pallas_src>

<mosaic_0001>
module attributes {stable_mosaic.version = 11 : i64} {
  func.func @kernel(%arg0: i32, %arg1: i32, %arg2: memref<1x72x128xbf16, #tpu.memory_space<vmem>>, %arg3: memref<1x72x128xbf16, #tpu.memory_space<vmem>>, %arg4: memref<3x128x128xbf16, #tpu.memory_space<vmem>>, %arg5: memref<1x128xf32, #tpu.memory_space<vmem>>, %arg6: memref<1x64x128xbf16, #tpu.memory_space<vmem>>) attributes {dimension_semantics = [#tpu.dimension_semantics<parallel>, #tpu.dimension_semantics<parallel>], iteration_bounds = array<i64: 2, 1>, scalar_prefetch = 0 : i64, scratch_operands = 0 : i64, tpu.core_type = #tpu.core_type<tc>, window_params = [{transform_indices = @transform_0, window_bounds = array<i64: 1, 72, 128>}, {transform_indices = @transform_1, window_bounds = array<i64: 1, 72, 128>}, {transform_indices = @transform_2, window_bounds = array<i64: 3, 128, 128>}, {transform_indices = @transform_3, window_bounds = array<i64: 1, 128>}, {transform_indices = @transform_4, window_bounds = array<i64: 1, 64, 128>}]} {
    %c0 = arith.constant 0 : index
    %c0_0 = arith.constant 0 : index
    %c0_1 = arith.constant 0 : index
    %0 = vector.load %arg2[%c0, %c0_0, %c0_1] : memref<1x72x128xbf16, #tpu.memory_space<vmem>>, vector<1x64x128xbf16>
    %1 = vector.shape_cast %0 : vector<1x64x128xbf16> to vector<64x128xbf16>
    %c0_2 = arith.constant 0 : index
    %c0_3 = arith.constant 0 : index
    %c0_4 = arith.constant 0 : index
    %2 = vector.load %arg4[%c0_2, %c0_3, %c0_4] : memref<3x128x128xbf16, #tpu.memory_space<vmem>>, vector<1x128x128xbf16>
    %3 = vector.shape_cast %2 : vector<1x128x128xbf16> to vector<128x128xbf16>
    %cst = arith.constant dense<0.000000e+00> : vector<64x128xf32>
    %4 = tpu.matmul %1, %3, %cst {dimension_numbers = #tpu.dot_dimension_numbers<[1], [0], [0], [1], [0, 0, 1, 1], [], []>} : vector<64x128xbf16>, vector<128x128xbf16>, vector<64x128xf32> -> vector<64x128xf32>
    %c0_5 = arith.constant 0 : index
    %c0_6 = arith.constant 0 : index
    %c0_7 = arith.constant 0 : index
    %5 = vector.load %arg3[%c0_5, %c0_6, %c0_7] : memref<1x72x128xbf16, #tpu.memory_space<vmem>>, vector<1x64x128xbf16>
    %6 = vector.shape_cast %5 : vector<1x64x128xbf16> to vector<64x128xbf16>
    %c1 = arith.constant 1 : index
    %c0_8 = arith.constant 0 : index
    %c0_9 = arith.constant 0 : index
    %7 = vector.load %arg4[%c1, %c0_8, %c0_9] : memref<3x128x128xbf16, #tpu.memory_space<vmem>>, vector<1x128x128xbf16>
    %8 = vector.shape_cast %7 : vector<1x128x128xbf16> to vector<128x128xbf16>
    %cst_10 = arith.constant dense<0.000000e+00> : vector<64x128xf32>
    %9 = tpu.matmul %6, %8, %cst_10 {dimension_numbers = #tpu.dot_dimension_numbers<[1], [0], [0], [1], [0, 0, 1, 1], [], []>} : vector<64x128xbf16>, vector<128x128xbf16>, vector<64x128xf32> -> vector<64x128xf32>
    %10 = arith.addf %4, %9 : vector<64x128xf32>
    %c0_11 = arith.constant 0 : index
    %c8 = arith.constant 8 : index
    %c0_12 = arith.constant 0 : index
    %11 = vector.load %arg2[%c0_11, %c8, %c0_12] : memref<1x72x128xbf16, #tpu.memory_space<vmem>>, vector<1x64x128xbf16>
    %12 = vector.shape_cast %11 : vector<1x64x128xbf16> to vector<64x128xbf16>
    %c2 = arith.constant 2 : index
    %c0_13 = arith.constant 0 : index
    %c0_14 = arith.constant 0 : index
    %13 = vector.load %arg4[%c2, %c0_13, %c0_14] : memref<3x128x128xbf16, #tpu.memory_space<vmem>>, vector<1x128x128xbf16>
    %14 = vector.shape_cast %13 : vector<1x128x128xbf16> to vector<128x128xbf16>
    %cst_15 = arith.constant dense<0.000000e+00> : vector<64x128xf32>
    %15 = tpu.matmul %12, %14, %cst_15 {dimension_numbers = #tpu.dot_dimension_numbers<[1], [0], [0], [1], [0, 0, 1, 1], [], []>} : vector<64x128xbf16>, vector<128x128xbf16>, vector<64x128xf32> -> vector<64x128xf32>
    %16 = arith.addf %10, %15 : vector<64x128xf32>
    %c0_16 = arith.constant 0 : index
    %c0_17 = arith.constant 0 : index
    %17 = vector.load %arg5[%c0_16, %c0_17] : memref<1x128xf32, #tpu.memory_space<vmem>>, vector<1x128xf32>
    %18 = vector.broadcast %17 : vector<1x128xf32> to vector<64x128xf32>
    %19 = arith.addf %16, %18 : vector<64x128xf32>
    %cst_18 = arith.constant 0.000000e+00 : f32
    %20 = vector.broadcast %cst_18 : f32 to vector<64x128xf32>
    %21 = arith.maximumf %19, %20 : vector<64x128xf32>
    %22 = arith.truncf %21 : vector<64x128xf32> to vector<64x128xbf16>
    %c0_19 = arith.constant 0 : index
    %c0_20 = arith.constant 0 : index
    %c0_21 = arith.constant 0 : index
    %23 = vector.load %arg6[%c0_19, %c0_20, %c0_21] : memref<1x64x128xbf16, #tpu.memory_space<vmem>>, vector<1x64x128xbf16>
    %24 = vector.shape_cast %23 : vector<1x64x128xbf16> to vector<64x128xbf16>
    %25 = vector.shape_cast %22 : vector<64x128xbf16> to vector<1x64x128xbf16>
    tpu.vector_store %arg6[%c0_19, %c0_20, %c0_21], %25 {strides = array<i32>} : memref<1x64x128xbf16, #tpu.memory_space<vmem>>, vector<1x64x128xbf16>,
    return
  }
  func.func @transform_0(%arg0: i32, %arg1: i32) -> (i32, i32, i32) {
    %c0_i32 = arith.constant 0 : i32
    %c0_i32_0 = arith.constant 0 : i32
    %c0_i32_1 = arith.constant 0 : i32
    return %arg0, %c0_i32, %c0_i32_0 : i32, i32, i32
  }
  func.func @transform_1(%arg0: i32, %arg1: i32) -> (i32, i32, i32) {
    %c0_i32 = arith.constant 0 : i32
    %c0_i32_0 = arith.constant 0 : i32
    %c0_i32_1 = arith.constant 0 : i32
    return %arg0, %c0_i32, %c0_i32_0 : i32, i32, i32
  }
  func.func @transform_2(%arg0: i32, %arg1: i32) -> (i32, i32, i32) {
    %c0_i32 = arith.constant 0 : i32
    %c0_i32_0 = arith.constant 0 : i32
    %c0_i32_1 = arith.constant 0 : i32
    return %c0_i32, %c0_i32_0, %arg1 : i32, i32, i32
  }
  func.func @transform_3(%arg0: i32, %arg1: i32) -> (i32, i32) {
    %c0_i32 = arith.constant 0 : i32
    %c0_i32_0 = arith.constant 0 : i32
    return %c0_i32, %arg1 : i32, i32
  }
  func.func @transform_4(%arg0: i32, %arg1: i32) -> (i32, i32, i32) {
    %c0_i32 = arith.constant 0 : i32
    %c0_i32_0 = arith.constant 0 : i32
    return %arg0, %c0_i32, %arg1 : i32, i32, i32
  }
}

module attributes {stable_mosaic.version = 11 : i64} {
  func.func @kernel(%arg0: i32, %arg1: i32, %arg2: memref<1x80x128xbf16, #tpu.memory_space<vmem>>, %arg3: memref<3x128x128xbf16, #tpu.memory_space<vmem>>, %arg4: memref<1x128xf32, #tpu.memory_space<vmem>>, %arg5: memref<1x64x128xbf16, #tpu.memory_space<vmem>>, %arg6: memref<128x128xbf16, #tpu.memory_space<vmem>>, %arg7: memref<1x64x128xbf16, #tpu.memory_space<vmem>>) attributes {dimension_semantics = [#tpu.dimension_semantics<parallel>, #tpu.dimension_semantics<parallel>], iteration_bounds = array<i64: 2, 1>, scalar_prefetch = 0 : i64, scratch_operands = 0 : i64, tpu.core_type = #tpu.core_type<tc>, window_params = [{transform_indices = @transform_0, window_bounds = array<i64: 1, 80, 128>}, {transform_indices = @transform_1, window_bounds = array<i64: 3, 128, 128>}, {transform_indices = @transform_2, window_bounds = array<i64: 1, 128>}, {transform_indices = @transform_3, window_bounds = array<i64: 1, 64, 128>}, {transform_indices = @transform_4, window_bounds = array<i64: 128, 128>}, {transform_indices = @transform_5, window_bounds = array<i64: 1, 64, 128>}]} {
    %c0 = arith.constant 0 : index
    %c0_0 = arith.constant 0 : index
    %c0_1 = arith.constant 0 : index
    %0 = vector.load %arg2[%c0, %c0_0, %c0_1] : memref<1x80x128xbf16, #tpu.memory_space<vmem>>, vector<1x64x128xbf16>
    %1 = vector.shape_cast %0 : vector<1x64x128xbf16> to vector<64x128xbf16>
    %c0_2 = arith.constant 0 : index
    %c0_3 = arith.constant 0 : index
    %c0_4 = arith.constant 0 : index
    %2 = vector.load %arg3[%c0_2, %c0_3, %c0_4] : memref<3x128x128xbf16, #tpu.memory_space<vmem>>, vector<1x128x128xbf16>
    %3 = vector.shape_cast %2 : vector<1x128x128xbf16> to vector<128x128xbf16>
    %cst = arith.constant dense<0.000000e+00> : vector<64x128xf32>
    %4 = tpu.matmul %1, %3, %cst {dimension_numbers = #tpu.dot_dimension_numbers<[1], [0], [0], [1], [0, 0, 1, 1], [], []>} : vector<64x128xbf16>, vector<128x128xbf16>, vector<64x128xf32> -> vector<64x128xf32>
    %c0_5 = arith.constant 0 : index
    %c8 = arith.constant 8 : index
    %c0_6 = arith.constant 0 : index
    %5 = vector.load %arg2[%c0_5, %c8, %c0_6] : memref<1x80x128xbf16, #tpu.memory_space<vmem>>, vector<1x64x128xbf16>
    %6 = vector.shape_cast %5 : vector<1x64x128xbf16> to vector<64x128xbf16>
    %c1 = arith.constant 1 : index
    %c0_7 = arith.constant 0 : index
    %c0_8 = arith.constant 0 : index
    %7 = vector.load %arg3[%c1, %c0_7, %c0_8] : memref<3x128x128xbf16, #tpu.memory_space<vmem>>, vector<1x128x128xbf16>
    %8 = vector.shape_cast %7 : vector<1x128x128xbf16> to vector<128x128xbf16>
    %cst_9 = arith.constant dense<0.000000e+00> : vector<64x128xf32>
    %9 = tpu.matmul %6, %8, %cst_9 {dimension_numbers = #tpu.dot_dimension_numbers<[1], [0], [0], [1], [0, 0, 1, 1], [], []>} : vector<64x128xbf16>, vector<128x128xbf16>, vector<64x128xf32> -> vector<64x128xf32>
    %10 = arith.addf %4, %9 : vector<64x128xf32>
    %c0_10 = arith.constant 0 : index
    %c16 = arith.constant 16 : index
    %c0_11 = arith.constant 0 : index
    %11 = vector.load %arg2[%c0_10, %c16, %c0_11] : memref<1x80x128xbf16, #tpu.memory_space<vmem>>, vector<1x64x128xbf16>
    %12 = vector.shape_cast %11 : vector<1x64x128xbf16> to vector<64x128xbf16>
    %c2 = arith.constant 2 : index
    %c0_12 = arith.constant 0 : index
    %c0_13 = arith.constant 0 : index
    %13 = vector.load %arg3[%c2, %c0_12, %c0_13] : memref<3x128x128xbf16, #tpu.memory_space<vmem>>, vector<1x128x128xbf16>
    %14 = vector.shape_cast %13 : vector<1x128x128xbf16> to vector<128x128xbf16>
    %cst_14 = arith.constant dense<0.000000e+00> : vector<64x128xf32>
    %15 = tpu.matmul %12, %14, %cst_14 {dimension_numbers = #tpu.dot_dimension_numbers<[1], [0], [0], [1], [0, 0, 1, 1], [], []>} : vector<64x128xbf16>, vector<128x128xbf16>, vector<64x128xf32> -> vector<64x128xf32>
    %16 = arith.addf %10, %15 : vector<64x128xf32>
    %c0_15 = arith.constant 0 : index
    %c0_16 = arith.constant 0 : index
    %c0_17 = arith.constant 0 : index
    %17 = vector.load %arg5[%c0_15, %c0_16, %c0_17] : memref<1x64x128xbf16, #tpu.memory_space<vmem>>, vector<1x64x128xbf16>
    %18 = vector.shape_cast %17 : vector<1x64x128xbf16> to vector<64x128xbf16>
    %c0_18 = arith.constant 0 : index
    %c0_19 = arith.constant 0 : index
    %19 = vector.load %arg6[%c0_18, %c0_19] : memref<128x128xbf16, #tpu.memory_space<vmem>>, vector<128x128xbf16>
    %cst_20 = arith.constant dense<0.000000e+00> : vector<64x128xf32>
    %20 = tpu.matmul %18, %19, %cst_20 {dimension_numbers = #tpu.dot_dimension_numbers<[1], [0], [0], [1], [0, 0, 1, 1], [], []>} : vector<64x128xbf16>, vector<128x128xbf16>, vector<64x128xf32> -> vector<64x128xf32>
    %21 = arith.addf %16, %20 : vector<64x128xf32>
    %c0_21 = arith.constant 0 : index
    %c0_22 = arith.constant 0 : index
    %22 = vector.load %arg4[%c0_21, %c0_22] : memref<1x128xf32, #tpu.memory_space<vmem>>, vector<1x128xf32>
    %23 = vector.broadcast %22 : vector<1x128xf32> to vector<64x128xf32>
    %24 = arith.addf %21, %23 : vector<64x128xf32>
    %cst_23 = arith.constant 0.000000e+00 : f32
    %25 = vector.broadcast %cst_23 : f32 to vector<64x128xf32>
    %26 = arith.maximumf %24, %25 : vector<64x128xf32>
    %27 = arith.truncf %26 : vector<64x128xf32> to vector<64x128xbf16>
    %c0_24 = arith.constant 0 : index
    %c0_25 = arith.constant 0 : index
    %c0_26 = arith.constant 0 : index
    %28 = vector.load %arg7[%c0_24, %c0_25, %c0_26] : memref<1x64x128xbf16, #tpu.memory_space<vmem>>, vector<1x64x128xbf16>
    %29 = vector.shape_cast %28 : vector<1x64x128xbf16> to vector<64x128xbf16>
    %30 = vector.shape_cast %27 : vector<64x128xbf16> to vector<1x64x128xbf16>
    tpu.vector_store %arg7[%c0_24, %c0_25, %c0_26], %30 {strides = array<i32>} : memref<1x64x128xbf16, #tpu.memory_space<vmem>>, vector<1x64x128xbf16>,
    return
  }
  func.func @transform_0(%arg0: i32, %arg1: i32) -> (i32, i32, i32) {
    %c0_i32 = arith.constant 0 : i32
    %c0_i32_0 = arith.constant 0 : i32
    %c0_i32_1 = arith.constant 0 : i32
    return %arg0, %c0_i32, %c0_i32_0 : i32, i32, i32
  }
  func.func @transform_1(%arg0: i32, %arg1: i32) -> (i32, i32, i32) {
    %c0_i32 = arith.constant 0 : i32
    %c0_i32_0 = arith.constant 0 : i32
    %c0_i32_1 = arith.constant 0 : i32
    return %c0_i32, %c0_i32_0, %arg1 : i32, i32, i32
  }
  func.func @transform_2(%arg0: i32, %arg1: i32) -> (i32, i32) {
    %c0_i32 = arith.constant 0 : i32
    %c0_i32_0 = arith.constant 0 : i32
    return %c0_i32, %arg1 : i32, i32
  }
  func.func @transform_3(%arg0: i32, %arg1: i32) -> (i32, i32, i32) {
    %c0_i32 = arith.constant 0 : i32
    %c0_i32_0 = arith.constant 0 : i32
    %c0_i32_1 = arith.constant 0 : i32
    return %arg0, %c0_i32, %c0_i32_0 : i32, i32, i32
  }
  func.func @transform_4(%arg0: i32, %arg1: i32) -> (i32, i32) {
    %c0_i32 = arith.constant 0 : i32
    %c0_i32_0 = arith.constant 0 : i32
    return %c0_i32, %arg1 : i32, i32
  }
  func.func @transform_5(%arg0: i32, %arg1: i32) -> (i32, i32, i32) {
    %c0_i32 = arith.constant 0 : i32
    %c0_i32_0 = arith.constant 0 : i32
    return %arg0, %c0_i32, %arg1 : i32, i32, i32
  }
}

</mosaic_0001>

<llo_original>
// kernel: basic_block_forward.2
$region0: #{basic_block_forward.2}
  #allocation0 [shape = 'u32[]', space=smem, size = 0x4, offset = 0x4, fixed_abs, tag = 'smem constant byte address 0x4 - core index']
  #allocation1 [shape = 'u32[144,128]{1,0:T(1,128)}', space=vmem, size = 0x12000, scoped, tag = 'internal scratch']
  %s0 = inlined_call_operand.vmem [shape: bf16[2,72,128], index: 0, kind: input, shape index: {}]
  %s1 = inlined_call_operand.vmem [shape: bf16[2,72,128], index: 1, kind: input, shape index: {}]
  %s2 = inlined_call_operand.vmem [shape: bf16[3,128,128], index: 2, kind: input, shape index: {}]
  %s3 = inlined_call_operand.vmem [shape: f32[1,128], index: 3, kind: input, shape index: {}]
  %s4 = inlined_call_operand.vmem [shape: bf16[2,64,128], index: 4, kind: output, shape index: {}]
  %s5 = sld [smem:[#allocation0]]
  $region49: #{basic_block_forward.2} parent=0
    _
  %s7 = ssub.s32 1, %s5
  %s8 = scalar_select 0, %s7, %s5
  loop: start=0, step=1, limit=4
  $region2: #{basic_block_forward.2} parent=0 // loop_pre_header
    _
  $region3: #{basic_block_forward.2} parent=0 // loop_header
    %s10 = sphi 0, %s14
    %p11 = scmp.ge.s32.totalorder %s10, 4
    %s17 = sphi 0, %s29
    %s18 = sphi 0, %s25
    %s19 = sphi 0, %s17
    %s20 = sphi 0, %s18
    %s21 = sphi 0, %s19
    %s22 = sphi 0, %s20
    %s32 = sphi 0, %s34
    %s35 = sphi 0, %s32
    %s36 = sphi 0, %s35
    %s52 = sphi 0, %s36
    %s58 = sphi 0, %s60
    %s61 = sphi 0, %s58
    %s62 = sphi 0, %s61
    %s78 = sphi 0, %s62
    %s84 = sphi 0, %s86
    %s87 = sphi 0, %s84
    %s88 = sphi 0, %s87
    %s104 = sphi 0, %s88
    %s110 = sphi 0, %s112
    %s113 = sphi 0, %s110
    %s114 = sphi 0, %s113
    %s130 = sphi 0, %s114
    %s138 = sphi 0, %s140
    %s141 = sphi 0, %s138
    %s142 = sphi 0, %s141
    %s158 = sphi 0, %s142
  $region4: #{basic_block_forward.2} parent=0 // loop_header_branch
    %13 = sbr.rel (%p11) target = $region8
  $region5: #{basic_block_forward.2} parent=0 // loop_body
    %s15 = ssub.s32 %s10, 1
    %s16 = ssub.s32 %s10, 2
    %s23 = sadd.s32 1, %s18
    %p24 = scmp.ge.s32.totalorder %s23, 1
    %s25 = scalar_select %p24, 0, %s23
    %s26 = sadd.s32 1, %s17
    %s27 = scalar_select %p24, %s26, %s17
    %p28 = scmp.ge.s32.totalorder %s27, 2
    %s29 = scalar_select %p28, 0, %s27
    %s30 = ssub.s32 %s17, %s29
    %p31 = scmp.eq.s32.totalorder %s30, 0
    %s33 = sadd.s32 %s32, 1
    %s34 = scalar_select %p31, %s32, %s33
    %p37 = pneg %p31
    %p38 = scmp.eq.s32.totalorder %s10, 1
    %p39 = por %p37, %p38
    %p40 = scmp.ne.s32.totalorder %s32, %s35
    %p41 = scmp.eq.s32.totalorder %s10, 0
    %p42 = por %p40, %p41
    %p43 = scmp.ne.s32.totalorder %s32, %s35
    %p44 = scmp.eq.s32.totalorder %s15, 1
    %p45 = por %p43, %p44
    %p46 = scmp.ne.s32.totalorder %s35, %s36
    %p47 = scmp.eq.s32.totalorder %s15, 0
    %p48 = por %p46, %p47
    %p49 = scmp.ne.s32.totalorder %s35, %s36
    %p50 = scmp.eq.s32.totalorder %s16, 1
    %p51 = por %p49, %p50
    %p53 = scmp.ne.s32.totalorder %s36, %s52
    %p54 = scmp.eq.s32.totalorder %s16, 0
    %p55 = por %p53, %p54
    %s56 = ssub.s32 %s17, %s29
    %p57 = scmp.eq.s32.totalorder %s56, 0
    %s59 = sadd.s32 %s58, 1
    %s60 = scalar_select %p57, %s58, %s59
    %p63 = pneg %p57
    %p64 = scmp.eq.s32.totalorder %s10, 1
    %p65 = por %p63, %p64
    %p66 = scmp.ne.s32.totalorder %s58, %s61
    %p67 = scmp.eq.s32.totalorder %s10, 0
    %p68 = por %p66, %p67
    %p69 = scmp.ne.s32.totalorder %s58, %s61
    %p70 = scmp.eq.s32.totalorder %s15, 1
    %p71 = por %p69, %p70
    %p72 = scmp.ne.s32.totalorder %s61, %s62
    %p73 = scmp.eq.s32.totalorder %s15, 0
    %p74 = por %p72, %p73
    %p75 = scmp.ne.s32.totalorder %s61, %s62
    %p76 = scmp.eq.s32.totalorder %s16, 1
    %p77 = por %p75, %p76
    %p79 = scmp.ne.s32.totalorder %s62, %s78
    %p80 = scmp.eq.s32.totalorder %s16, 0
    %p81 = por %p79, %p80
    %s82 = ssub.s32 %s18, %s25
    %p83 = scmp.eq.s32.totalorder %s82, 0
    %s85 = sadd.s32 %s84, 1
    %s86 = scalar_select %p83, %s84, %s85
    %p89 = pneg %p83
    %p90 = scmp.eq.s32.totalorder %s10, 1
    %p91 = por %p89, %p90
    %p92 = scmp.ne.s32.totalorder %s84, %s87
    %p93 = scmp.eq.s32.totalorder %s10, 0
    %p94 = por %p92, %p93
    %p95 = scmp.ne.s32.totalorder %s84, %s87
    %p96 = scmp.eq.s32.totalorder %s15, 1
    %p97 = por %p95, %p96
    %p98 = scmp.ne.s32.totalorder %s87, %s88
    %p99 = scmp.eq.s32.totalorder %s15, 0
    %p100 = por %p98, %p99
    %p101 = scmp.ne.s32.totalorder %s87, %s88
    %p102 = scmp.eq.s32.totalorder %s16, 1
    %p103 = por %p101, %p102
    %p105 = scmp.ne.s32.totalorder %s88, %s104
    %p106 = scmp.eq.s32.totalorder %s16, 0
    %p107 = por %p105, %p106
    %s108 = ssub.s32 %s18, %s25
    %p109 = scmp.eq.s32.totalorder %s108, 0
    %s111 = sadd.s32 %s110, 1
    %s112 = scalar_select %p109, %s110, %s111
    %p115 = pneg %p109
    %p116 = scmp.eq.s32.totalorder %s10, 1
    %p117 = por %p115, %p116
    %p118 = scmp.ne.s32.totalorder %s110, %s113
    %p119 = scmp.eq.s32.totalorder %s10, 0
    %p120 = por %p118, %p119
    %p121 = scmp.ne.s32.totalorder %s110, %s113
    %p122 = scmp.eq.s32.totalorder %s15, 1
    %p123 = por %p121, %p122
    %p124 = scmp.ne.s32.totalorder %s113, %s114
    %p125 = scmp.eq.s32.totalorder %s15, 0
    %p126 = por %p124, %p125
    %p127 = scmp.ne.s32.totalorder %s113, %s114
    %p128 = scmp.eq.s32.totalorder %s16, 1
    %p129 = por %p127, %p128
    %p131 = scmp.ne.s32.totalorder %s114, %s130
    %p132 = scmp.eq.s32.totalorder %s16, 0
    %p133 = por %p131, %p132
    %s134 = ssub.s32 %s17, %s29
    %s135 = ssub.s32 %s18, %s25
    %s136 = sor.u32 %s134, %s135
    %p137 = scmp.eq.s32.totalorder %s136, 0
    %s139 = sadd.s32 %s138, 1
    %s140 = scalar_select %p137, %s138, %s139
    %p143 = pneg %p137
    %p144 = scmp.eq.s32.totalorder %s10, 1
    %p145 = por %p143, %p144
    %p146 = scmp.ne.s32.totalorder %s138, %s141
    %p147 = scmp.eq.s32.totalorder %s10, 0
    %p148 = por %p146, %p147
    %p149 = scmp.ne.s32.totalorder %s138, %s141
    %p150 = scmp.eq.s32.totalorder %s15, 1
    %p151 = por %p149, %p150
    %p152 = scmp.ne.s32.totalorder %s141, %s142
    %p153 = scmp.eq.s32.totalorder %s15, 0
    %p154 = por %p152, %p153
    %p155 = scmp.ne.s32.totalorder %s141, %s142
    %p156 = scmp.eq.s32.totalorder %s16, 1
    %p157 = por %p155, %p156
    %p159 = scmp.ne.s32.totalorder %s142, %s158
    %p160 = scmp.eq.s32.totalorder %s16, 0
    %p161 = por %p159, %p160
    %p162 = scmp.le.s32.totalorder 1, %s10
    %p163 = scmp.lt.s32.totalorder %s10, 3
    %p164 = pnand %p162, %p163
    %p165 = pneg %p164
    // Predicated region
    $region9: #{basic_block_forward.2} parent=5 // pred_check
      _
    $region10: #{basic_block_forward.2} parent=5 // pred_check_branch
      %167 = sbr.rel (%p164) target = $region12
    $region11: #{basic_block_forward.2} parent=5 // pred_region
      %s168 = ssub.s32 %s10, 1
      // Predicated region
      $region13: #{basic_block_forward.2} parent=11 // pred_check
        %p169 = pneg %p100
      $region14: #{basic_block_forward.2} parent=11 // pred_check_branch
        %171 = sbr.rel (%p169) target = $region16
      $region15: #{basic_block_forward.2} parent=11 // pred_region
        %p172 = scmp.lt.s32.totalorder %s20, 0
        %s173 = scalar_select %p172, %s20, 0
        %s174 = smul.addr %s173, 4
        %s175 = scalar_lea.vmem %s2, %s174
      $region16: #{basic_block_forward.2} parent=11 // pred_fallthru
        _
      // Predicated region
      $region17: #{basic_block_forward.2} parent=11 // pred_check
        %p176 = pneg %p126
      $region18: #{basic_block_forward.2} parent=11 // pred_check_branch
        %178 = sbr.rel (%p176) target = $region20
      $region19: #{basic_block_forward.2} parent=11 // pred_region
        %p179 = scmp.lt.s32.totalorder %s20, 0
        %s180 = scalar_select %p179, %s20, 0
        %s181 = scalar_lea.vmem %s3, %s180
      $region20: #{basic_block_forward.2} parent=11 // pred_fallthru
        _
    $region12: #{basic_block_forward.2} parent=5 // pred_fallthru
      _
    %p182 = scmp.lt.s32.totalorder %s10, 2
    // Predicated region
    $region21: #{basic_block_forward.2} parent=5 // pred_check
      %p183 = pneg %p182
    $region22: #{basic_block_forward.2} parent=5 // pred_check_branch
      %185 = sbr.rel (%p183) target = $region24
    $region23: #{basic_block_forward.2} parent=5 // pred_region
      // Predicated region
      $region25: #{basic_block_forward.2} parent=23 // pred_check
        %p186 = pneg %p42
      $region26: #{basic_block_forward.2} parent=23 // pred_check_branch
        %188 = sbr.rel (%p186) target = $region28
      $region27: #{basic_block_forward.2} parent=23 // pred_region
        %p189 = scmp.lt.s32.totalorder %s17, 1
        %s190 = scalar_select %p189, %s17, 1
        %s191 = smul.addr %s190, 9
        %s192 = smul.addr %s191, 4
        %s193 = scalar_lea.vmem %s0, %s192
      $region28: #{basic_block_forward.2} parent=23 // pred_fallthru
        _
      // Predicated region
      $region29: #{basic_block_forward.2} parent=23 // pred_check
        %p194 = pneg %p68
      $region30: #{basic_block_forward.2} parent=23 // pred_check_branch
        %196 = sbr.rel (%p194) target = $region32
      $region31: #{basic_block_forward.2} parent=23 // pred_region
        %p197 = scmp.lt.s32.totalorder %s17, 1
        %s198 = scalar_select %p197, %s17, 1
        %s199 = smul.addr %s198, 9
        %s200 = smul.addr %s199, 4
        %s201 = scalar_lea.vmem %s1, %s200
      $region32: #{basic_block_forward.2} parent=23 // pred_fallthru
        _
    $region24: #{basic_block_forward.2} parent=5 // pred_fallthru
      _
    %p202 = scmp.le.s32.totalorder 1, %s10
    %p203 = scmp.lt.s32.totalorder %s10, 3
    %p204 = pnand %p202, %p203
    %p205 = pneg %p204
    // Predicated region
    $region33: #{basic_block_forward.2} parent=5 // pred_check
      _
    $region34: #{basic_block_forward.2} parent=5 // pred_check_branch
      %207 = sbr.rel (%p204) target = $region36
    $region35: #{basic_block_forward.2} parent=5 // pred_region
      %s208 = ssub.s32 %s10, 1
      %p209 = scmp.lt.s32.totalorder %s19, 1
      %s210 = scalar_select %p209, %s19, 1
      %s211 = smul.addr %s210, 9
      %s212 = smul.addr %s211, 4
      %s213 = scalar_lea.vmem %s0, %s212
      %p214 = pneg %p48
      %p215 = pneg %p45
      %p216 = scmp.lt.s32.totalorder %s19, 1
      %s217 = scalar_select %p216, %s19, 1
      %s218 = smul.addr %s217, 9
      %s219 = smul.addr %s218, 4
      %s220 = scalar_lea.vmem %s1, %s219
      %p221 = pneg %p74
      %p222 = pneg %p71
      %p223 = scmp.lt.s32.totalorder %s20, 0
      %s224 = scalar_select %p223, %s20, 0
      %s225 = smul.addr %s224, 4
      %s226 = scalar_lea.vmem %s2, %s225
      %p227 = pneg %p100
      %p228 = pneg %p97
      %p229 = scmp.lt.s32.totalorder %s20, 0
      %s230 = scalar_select %p229, %s20, 0
      %s231 = scalar_lea.vmem %s3, %s230
      %p232 = pneg %p126
      %p233 = pneg %p123
      %p234 = pneg %p154
      %p235 = pneg %p151
      %p236 = scmp.lt.s32.totalorder %s19, 1
      %s237 = scalar_select %p236, %s19, 1
      %p238 = scmp.lt.s32.totalorder %s20, 0
      %s239 = scalar_select %p238, %s20, 0
      %s240 = smul.addr %s237, 8
      %s241 = sadd.s32 %s239, %s240
      %s242 = smul.addr %s241, 4
      %s243 = scalar_lea.vmem %s4, %s242
      %p244 = scmp.lt.s32.totalorder %s19, 1
      %s245 = scalar_select %p244, %s19, 1
      %s246 = smul.addr %s245, 9
      %s247 = smul.addr %s246, 4
      %s248 = scalar_lea.vmem %s0, %s247
      %p249 = scmp.lt.s32.totalorder %s19, 1
      %s250 = scalar_select %p249, %s19, 1
      %s251 = smul.addr %s250, 9
      %s252 = smul.addr %s251, 4
      %s253 = scalar_lea.vmem %s1, %s252
      %p254 = scmp.lt.s32.totalorder %s20, 0
      %s255 = scalar_select %p254, %s20, 0
      %s256 = smul.addr %s255, 4
      %s257 = scalar_lea.vmem %s2, %s256
      %p258 = scmp.lt.s32.totalorder %s20, 0
      %s259 = scalar_select %p258, %s20, 0
      %s260 = scalar_lea.vmem %s3, %s259
      %p261 = scmp.lt.s32.totalorder %s19, 1
      %s262 = scalar_select %p261, %s19, 1
      %p263 = scmp.lt.s32.totalorder %s20, 0
      %s264 = scalar_select %p263, %s20, 0
      %s265 = smul.addr %s262, 8
      %s266 = sadd.s32 %s264, %s265
      %s267 = smul.addr %s266, 4
      %s268 = scalar_lea.vmem %s4, %s267
      %v270 = vld [vmem:[%s248] sm:$0xf]
      %v271 = vld [vmem:[%s248 + $0x4] sm:$0xf]
      %v272 = vld [vmem:[%s248 + $0x8] sm:$0xf]
      %v273 = vld [vmem:[%s248 + $0xc] sm:$0xf]
      %v274 = vld [vmem:[%s248 + $0x10] sm:$0xf]
      %v275 = vld [vmem:[%s248 + $0x14] sm:$0xf]
      %v276 = vld [vmem:[%s248 + $0x18] sm:$0xf]
      %v277 = vld [vmem:[%s248 + $0x1c] sm:$0xf]
      %v278 = vld [vmem:[%s257] sm:$0xf]
      %v279 = vld [vmem:[%s257 + $0x4] sm:$0xf]
      %v280 = vld [vmem:[%s257 + $0x8] sm:$0xf]
      %v281 = vld [vmem:[%s257 + $0xc] sm:$0xf]
      %v282 = vld [vmem:[%s257 + $0x10] sm:$0xf]
      %v283 = vld [vmem:[%s257 + $0x14] sm:$0xf]
      %v284 = vld [vmem:[%s257 + $0x18] sm:$0xf]
      %v285 = vld [vmem:[%s257 + $0x1c] sm:$0xf]
      %v286 = vld [vmem:[%s257 + $0x20] sm:$0xf]
      %v287 = vld [vmem:[%s257 + $0x24] sm:$0xf]
      %v288 = vld [vmem:[%s257 + $0x28] sm:$0xf]
      %v289 = vld [vmem:[%s257 + $0x2c] sm:$0xf]
      %v290 = vld [vmem:[%s257 + $0x30] sm:$0xf]
      %v291 = vld [vmem:[%s257 + $0x34] sm:$0xf]
      %v292 = vld [vmem:[%s257 + $0x38] sm:$0xf]
      %v293 = vld [vmem:[%s257 + $0x3c] sm:$0xf]
      %v294 = vld [vmem:[%s253] sm:$0xf]
      %v295 = vld [vmem:[%s253 + $0x4] sm:$0xf]
      %v296 = vld [vmem:[%s253 + $0x8] sm:$0xf]
      %v297 = vld [vmem:[%s253 + $0xc] sm:$0xf]
      %v298 = vld [vmem:[%s253 + $0x10] sm:$0xf]
      %v299 = vld [vmem:[%s253 + $0x14] sm:$0xf]
      %v300 = vld [vmem:[%s253 + $0x18] sm:$0xf]
      %v301 = vld [vmem:[%s253 + $0x1c] sm:$0xf]
      %s302 = scalar_lea.vmem %s257, 64
      %v303 = vld [vmem:[%s302] sm:$0xf]
      %v304 = vld [vmem:[%s302 + $0x4] sm:$0xf]
      %v305 = vld [vmem:[%s302 + $0x8] sm:$0xf]
      %v306 = vld [vmem:[%s302 + $0xc] sm:$0xf]
      %v307 = vld [vmem:[%s302 + $0x10] sm:$0xf]
      %v308 = vld [vmem:[%s302 + $0x14] sm:$0xf]
      %v309 = vld [vmem:[%s302 + $0x18] sm:$0xf]
      %v310 = vld [vmem:[%s302 + $0x1c] sm:$0xf]
      %v311 = vld [vmem:[%s302 + $0x20] sm:$0xf]
      %v312 = vld [vmem:[%s302 + $0x24] sm:$0xf]
      %v313 = vld [vmem:[%s302 + $0x28] sm:$0xf]
      %v314 = vld [vmem:[%s302 + $0x2c] sm:$0xf]
      %v315 = vld [vmem:[%s302 + $0x30] sm:$0xf]
      %v316 = vld [vmem:[%s302 + $0x34] sm:$0xf]
      %v317 = vld [vmem:[%s302 + $0x38] sm:$0xf]
      %v318 = vld [vmem:[%s302 + $0x3c] sm:$0xf]
      %v327 = vunpack.c.l.b16 %v294
      %v328 = vunpack.c.l.b16 %v295
      %v329 = vunpack.c.l.b16 %v296
      %v330 = vunpack.c.l.b16 %v297
      %v331 = vunpack.c.l.b16 %v298
      %v332 = vunpack.c.l.b16 %v299
      %v333 = vunpack.c.l.b16 %v300
      %v334 = vunpack.c.l.b16 %v301
      %v335 = vpack.c.b16 %v328, %v327
      %v336 = vpack.c.b16 %v330, %v329
      %v337 = vpack.c.b16 %v332, %v331
      %v338 = vpack.c.b16 %v334, %v333
      %v359 = vunpack.c.l.b16 %v303
      %v360 = vunpack.c.l.b16 %v304
      %v361 = vunpack.c.l.b16 %v305
      %v362 = vunpack.c.l.b16 %v306
      %v363 = vunpack.c.l.b16 %v307
      %v364 = vunpack.c.l.b16 %v308
      %v365 = vunpack.c.l.b16 %v309
      %v366 = vunpack.c.l.b16 %v310
      %v367 = vunpack.c.l.b16 %v311
      %v368 = vunpack.c.l.b16 %v312
      %v369 = vunpack.c.l.b16 %v313
      %v370 = vunpack.c.l.b16 %v314
      %v371 = vunpack.c.l.b16 %v315
      %v372 = vunpack.c.l.b16 %v316
      %v373 = vunpack.c.l.b16 %v317
      %v374 = vunpack.c.l.b16 %v318
      %v375 = vpack.c.b16 %v360, %v359
      %v376 = vpack.c.b16 %v362, %v361
      %v377 = vpack.c.b16 %v364, %v363
      %v378 = vpack.c.b16 %v366, %v365
      %v379 = vpack.c.b16 %v368, %v367
      %v380 = vpack.c.b16 %v370, %v369
      %v381 = vpack.c.b16 %v372, %v371
      %v382 = vpack.c.b16 %v374, %v373
      %391 = vmatprep.subr.bf16.mxu0 0
      %392 = vmatpush1.bf16.msra.mxu0 %v382
      %393 = vmatprep.subr.bf16.mxu0 0
      %394 = vmatpush1.bf16.msra.mxu0 %v381
      %395 = vmatprep.subr.bf16.mxu0 0
      %396 = vmatpush1.bf16.msra.mxu0 %v380
      %397 = vmatprep.subr.bf16.mxu0 0
      %398 = vmatpush1.bf16.msra.mxu0 %v379
      %399 = vmatprep.subr.bf16.mxu0 0
      %400 = vmatpush1.bf16.msra.mxu0 %v378
      %401 = vmatprep.subr.bf16.mxu0 0
      %402 = vmatpush1.bf16.msra.mxu0 %v377
      %403 = vmatprep.subr.bf16.mxu0 0
      %404 = vmatpush1.bf16.msra.mxu0 %v376
      %405 = vmatprep.subr.bf16.mxu0 0
      %406 = vmatpush1.bf16.msra.mxu0 %v375
      %407 = vmatprep.subr.bf16.mxu0 0
      %408 = vmatpush2.bf16.msra.mxu0 0
      %409 = vmatprep.subr.bf16.mxu0 0
      %410 = vmatpush2.bf16.msra.mxu0 0
      %411 = vmatprep.subr.bf16.mxu0 0
      %412 = vmatpush2.bf16.msra.mxu0 0
      %413 = vmatprep.subr.bf16.mxu0 0
      %414 = vmatpush2.bf16.msra.mxu0 0
      %415 = vmatprep.subr.bf16.mxu0 0
      %416 = vmatpush2.bf16.msra.mxu0 0
      %417 = vmatprep.subr.bf16.mxu0 0
      %418 = vmatpush2.bf16.msra.mxu0 0
      %419 = vmatprep.subr.bf16.mxu0 0
      %420 = vmatpush2.bf16.msra.mxu0 0
      %421 = vmatprep.subr.bf16.mxu0 0
      %422 = vmatpush2.bf16.msra.mxu0 0
      %423 = vmatprep.mubr.bf16.mxu0 0
      %424 = vmatmul.mubr.bf16.gmra.mxu0 %v335
      %v425 = vpop.f32.mrf.mxu0
      %v426 = vadd.f32 0.0, %v425
      %v427 = vpop.f32.mrf.mxu0
      %v428 = vpop.f32.mrf.mxu0
      %v429 = vadd.f32 0.0, %v428
      %v430 = vpop.f32.mrf.mxu0
      %431 = vmatprep.mubr.bf16.mxu0 0
      %432 = vmatmul.mubr.bf16.gmra.mxu0 %v336
      %v433 = vpop.f32.mrf.mxu0
      %v434 = vadd.f32 0.0, %v433
      %v435 = vpop.f32.mrf.mxu0
      %v436 = vpop.f32.mrf.mxu0
      %v437 = vadd.f32 0.0, %v436
      %v438 = vpop.f32.mrf.mxu0
      %439 = vmatprep.mubr.bf16.mxu0 0
      %440 = vmatmul.mubr.bf16.gmra.mxu0 %v337
      %v441 = vpop.f32.mrf.mxu0
      %v442 = vadd.f32 0.0, %v441
      %v443 = vpop.f32.mrf.mxu0
      %v444 = vpop.f32.mrf.mxu0
      %v445 = vadd.f32 0.0, %v444
      %v446 = vpop.f32.mrf.mxu0
      %447 = vmatprep.mubr.bf16.mxu0 0
      %448 = vmatmul.mubr.bf16.gmra.mxu0 %v338
      %v449 = vpop.f32.mrf.mxu0
      %v450 = vadd.f32 0.0, %v449
      %v451 = vpop.f32.mrf.mxu0
      %v452 = vpop.f32.mrf.mxu0
      %v453 = vadd.f32 0.0, %v452
      %v454 = vpop.f32.mrf.mxu0
      %455 = vdwg.mxu0
      %v464 = vunpack.c.l.b16 %v270
      %v465 = vunpack.c.l.b16 %v271
      %v466 = vunpack.c.l.b16 %v272
      %v467 = vunpack.c.l.b16 %v273
      %v468 = vunpack.c.l.b16 %v274
      %v469 = vunpack.c.l.b16 %v275
      %v470 = vunpack.c.l.b16 %v276
      %v471 = vunpack.c.l.b16 %v277
      %v472 = vpack.c.b16 %v465, %v464
      %v473 = vpack.c.b16 %v467, %v466
      %v474 = vpack.c.b16 %v469, %v468
      %v475 = vpack.c.b16 %v471, %v470
      %v496 = vunpack.c.l.b16 %v278
      %v497 = vunpack.c.l.b16 %v279
      %v498 = vunpack.c.l.b16 %v280
      %v499 = vunpack.c.l.b16 %v281
      %v500 = vunpack.c.l.b16 %v282
      %v501 = vunpack.c.l.b16 %v283
      %v502 = vunpack.c.l.b16 %v284
      %v503 = vunpack.c.l.b16 %v285
      %v504 = vunpack.c.l.b16 %v286
      %v505 = vunpack.c.l.b16 %v287
      %v506 = vunpack.c.l.b16 %v288
      %v507 = vunpack.c.l.b16 %v289
      %v508 = vunpack.c.l.b16 %v290
      %v509 = vunpack.c.l.b16 %v291
      %v510 = vunpack.c.l.b16 %v292
      %v511 = vunpack.c.l.b16 %v293
      %v512 = vpack.c.b16 %v497, %v496
      %v513 = vpack.c.b16 %v499, %v498
      %v514 = vpack.c.b16 %v501, %v500
      %v515 = vpack.c.b16 %v503, %v502
      %v516 = vpack.c.b16 %v505, %v504
      %v517 = vpack.c.b16 %v507, %v506
      %v518 = vpack.c.b16 %v509, %v508
      %v519 = vpack.c.b16 %v511, %v510
      %528 = vmatprep.subr.bf16.mxu0 0
      %529 = vmatpush1.bf16.msra.mxu0 %v519
      %530 = vmatprep.subr.bf16.mxu0 0
      %531 = vmatpush1.bf16.msra.mxu0 %v518
      %532 = vmatprep.subr.bf16.mxu0 0
      %533 = vmatpush1.bf16.msra.mxu0 %v517
      %534 = vmatprep.subr.bf16.mxu0 0
      %535 = vmatpush1.bf16.msra.mxu0 %v516
      %536 = vmatprep.subr.bf16.mxu0 0
      %537 = vmatpush1.bf16.msra.mxu0 %v515
      %538 = vmatprep.subr.bf16.mxu0 0
      %539 = vmatpush1.bf16.msra.mxu0 %v514
      %540 = vmatprep.subr.bf16.mxu0 0
      %541 = vmatpush1.bf16.msra.mxu0 %v513
      %542 = vmatprep.subr.bf16.mxu0 0
      %543 = vmatpush1.bf16.msra.mxu0 %v512
      %544 = vmatprep.subr.bf16.mxu0 0
      %545 = vmatpush2.bf16.msra.mxu0 0
      %546 = vmatprep.subr.bf16.mxu0 0
      %547 = vmatpush2.bf16.msra.mxu0 0
      %548 = vmatprep.subr.bf16.mxu0 0
      %549 = vmatpush2.bf16.msra.mxu0 0
      %550 = vmatprep.subr.bf16.mxu0 0
      %551 = vmatpush2.bf16.msra.mxu0 0
      %552 = vmatprep.subr.bf16.mxu0 0
      %553 = vmatpush2.bf16.msra.mxu0 0
      %554 = vmatprep.subr.bf16.mxu0 0
      %555 = vmatpush2.bf16.msra.mxu0 0
      %556 = vmatprep.subr.bf16.mxu0 0
      %557 = vmatpush2.bf16.msra.mxu0 0
      %558 = vmatprep.subr.bf16.mxu0 0
      %559 = vmatpush2.bf16.msra.mxu0 0
      %560 = vmatprep.mubr.bf16.mxu0 0
      %561 = vmatmul.mubr.bf16.gmra.mxu0 %v472
      %v562 = vpop.f32.mrf.mxu0
      %v563 = vadd.f32 %v426, %v562
      %v564 = vpop.f32.mrf.mxu0
      %v565 = vpop.f32.mrf.mxu0
      %v566 = vadd.f32 %v429, %v565
      %v567 = vpop.f32.mrf.mxu0
      %568 = vmatprep.mubr.bf16.mxu0 0
      %569 = vmatmul.mubr.bf16.gmra.mxu0 %v473
      %v570 = vpop.f32.mrf.mxu0
      %v571 = vadd.f32 %v434, %v570
      %v572 = vpop.f32.mrf.mxu0
      %v573 = vpop.f32.mrf.mxu0
      %v574 = vadd.f32 %v437, %v573
      %v575 = vpop.f32.mrf.mxu0
      %576 = vmatprep.mubr.bf16.mxu0 0
      %577 = vmatmul.mubr.bf16.gmra.mxu0 %v474
      %v578 = vpop.f32.mrf.mxu0
      %v579 = vadd.f32 %v442, %v578
      %v580 = vpop.f32.mrf.mxu0
      %v581 = vpop.f32.mrf.mxu0
      %v582 = vadd.f32 %v445, %v581
      %v583 = vpop.f32.mrf.mxu0
      %584 = vmatprep.mubr.bf16.mxu0 0
      %585 = vmatmul.mubr.bf16.gmra.mxu0 %v475
      %v586 = vpop.f32.mrf.mxu0
      %v587 = vadd.f32 %v450, %v586
      %v588 = vpop.f32.mrf.mxu0
      %v589 = vpop.f32.mrf.mxu0
      %v590 = vadd.f32 %v453, %v589
      %v591 = vpop.f32.mrf.mxu0
      %592 = vdwg.mxu0
      %v593 = vld [vmem:[%s248 + $0x4] sm:$0xf]
      %v594 = vld [vmem:[%s248 + $0x8] sm:$0xf]
      %v595 = vld [vmem:[%s248 + $0xc] sm:$0xf]
      %v596 = vld [vmem:[%s248 + $0x10] sm:$0xf]
      %v597 = vld [vmem:[%s248 + $0x14] sm:$0xf]
      %v598 = vld [vmem:[%s248 + $0x18] sm:$0xf]
      %v599 = vld [vmem:[%s248 + $0x1c] sm:$0xf]
      %v600 = vld [vmem:[%s248 + $0x20] sm:$0xf]
      %s601 = scalar_lea.vmem %s257, 128
      %v602 = vld [vmem:[%s601] sm:$0xf]
      %v603 = vld [vmem:[%s601 + $0x4] sm:$0xf]
      %v604 = vld [vmem:[%s601 + $0x8] sm:$0xf]
      %v605 = vld [vmem:[%s601 + $0xc] sm:$0xf]
      %v606 = vld [vmem:[%s601 + $0x10] sm:$0xf]
      %v607 = vld [vmem:[%s601 + $0x14] sm:$0xf]
      %v608 = vld [vmem:[%s601 + $0x18] sm:$0xf]
      %v609 = vld [vmem:[%s601 + $0x1c] sm:$0xf]
      %v610 = vld [vmem:[%s601 + $0x20] sm:$0xf]
      %v611 = vld [vmem:[%s601 + $0x24] sm:$0xf]
      %v612 = vld [vmem:[%s601 + $0x28] sm:$0xf]
      %v613 = vld [vmem:[%s601 + $0x2c] sm:$0xf]
      %v614 = vld [vmem:[%s601 + $0x30] sm:$0xf]
      %v615 = vld [vmem:[%s601 + $0x34] sm:$0xf]
      %v616 = vld [vmem:[%s601 + $0x38] sm:$0xf]
      %v617 = vld [vmem:[%s601 + $0x3c] sm:$0xf]
      %v626 = vunpack.c.l.b16 %v593
      %v627 = vunpack.c.l.b16 %v594
      %v628 = vunpack.c.l.b16 %v595
      %v629 = vunpack.c.l.b16 %v596
      %v630 = vunpack.c.l.b16 %v597
      %v631 = vunpack.c.l.b16 %v598
      %v632 = vunpack.c.l.b16 %v599
      %v633 = vunpack.c.l.b16 %v600
      %v634 = vpack.c.b16 %v627, %v626
      %v635 = vpack.c.b16 %v629, %v628
      %v636 = vpack.c.b16 %v631, %v630
      %v637 = vpack.c.b16 %v633, %v632
      %v658 = vunpack.c.l.b16 %v602
      %v659 = vunpack.c.l.b16 %v603
      %v660 = vunpack.c.l.b16 %v604
      %v661 = vunpack.c.l.b16 %v605
      %v662 = vunpack.c.l.b16 %v606
      %v663 = vunpack.c.l.b16 %v607
      %v664 = vunpack.c.l.b16 %v608
      %v665 = vunpack.c.l.b16 %v609
      %v666 = vunpack.c.l.b16 %v610
      %v667 = vunpack.c.l.b16 %v611
      %v668 = vunpack.c.l.b16 %v612
      %v669 = vunpack.c.l.b16 %v613
      %v670 = vunpack.c.l.b16 %v614
      %v671 = vunpack.c.l.b16 %v615
      %v672 = vunpack.c.l.b16 %v616
      %v673 = vunpack.c.l.b16 %v617
      %v674 = vpack.c.b16 %v659, %v658
      %v675 = vpack.c.b16 %v661, %v660
      %v676 = vpack.c.b16 %v663, %v662
      %v677 = vpack.c.b16 %v665, %v664
      %v678 = vpack.c.b16 %v667, %v666
      %v679 = vpack.c.b16 %v669, %v668
      %v680 = vpack.c.b16 %v671, %v670
      %v681 = vpack.c.b16 %v673, %v672
      %690 = vmatprep.subr.bf16.mxu0 0
      %691 = vmatpush1.bf16.msra.mxu0 %v681
      %692 = vmatprep.subr.bf16.mxu0 0
      %693 = vmatpush1.bf16.msra.mxu0 %v680
      %694 = vmatprep.subr.bf16.mxu0 0
      %695 = vmatpush1.bf16.msra.mxu0 %v679
      %696 = vmatprep.subr.bf16.mxu0 0
      %697 = vmatpush1.bf16.msra.mxu0 %v678
      %698 = vmatprep.subr.bf16.mxu0 0
      %699 = vmatpush1.bf16.msra.mxu0 %v677
      %700 = vmatprep.subr.bf16.mxu0 0
      %701 = vmatpush1.bf16.msra.mxu0 %v676
      %702 = vmatprep.subr.bf16.mxu0 0
      %703 = vmatpush1.bf16.msra.mxu0 %v675
      %704 = vmatprep.subr.bf16.mxu0 0
      %705 = vmatpush1.bf16.msra.mxu0 %v674
      %706 = vmatprep.subr.bf16.mxu0 0
      %707 = vmatpush2.bf16.msra.mxu0 0
      %708 = vmatprep.subr.bf16.mxu0 0
      %709 = vmatpush2.bf16.msra.mxu0 0
      %710 = vmatprep.subr.bf16.mxu0 0
      %711 = vmatpush2.bf16.msra.mxu0 0
      %712 = vmatprep.subr.bf16.mxu0 0
      %713 = vmatpush2.bf16.msra.mxu0 0
      %714 = vmatprep.subr.bf16.mxu0 0
      %715 = vmatpush2.bf16.msra.mxu0 0
      %716 = vmatprep.subr.bf16.mxu0 0
      %717 = vmatpush2.bf16.msra.mxu0 0
      %718 = vmatprep.subr.bf16.mxu0 0
      %719 = vmatpush2.bf16.msra.mxu0 0
      %720 = vmatprep.subr.bf16.mxu0 0
      %721 = vmatpush2.bf16.msra.mxu0 0
      %722 = vmatprep.mubr.bf16.mxu0 0
      %723 = vmatmul.mubr.bf16.gmra.mxu0 %v634
      %v724 = vpop.f32.mrf.mxu0
      %v725 = vadd.f32 0.0, %v724
      %v726 = vpop.f32.mrf.mxu0
      %v727 = vpop.f32.mrf.mxu0
      %v728 = vadd.f32 0.0, %v727
      %v729 = vpop.f32.mrf.mxu0
      %730 = vmatprep.mubr.bf16.mxu0 0
      %731 = vmatmul.mubr.bf16.gmra.mxu0 %v635
      %v732 = vpop.f32.mrf.mxu0
      %v733 = vadd.f32 0.0, %v732
      %v734 = vpop.f32.mrf.mxu0
      %v735 = vpop.f32.mrf.mxu0
      %v736 = vadd.f32 0.0, %v735
      %v737 = vpop.f32.mrf.mxu0
      %738 = vmatprep.mubr.bf16.mxu0 0
      %739 = vmatmul.mubr.bf16.gmra.mxu0 %v636
      %v740 = vpop.f32.mrf.mxu0
      %v741 = vadd.f32 0.0, %v740
      %v742 = vpop.f32.mrf.mxu0
      %v743 = vpop.f32.mrf.mxu0
      %v744 = vadd.f32 0.0, %v743
      %v745 = vpop.f32.mrf.mxu0
      %746 = vmatprep.mubr.bf16.mxu0 0
      %747 = vmatmul.mubr.bf16.gmra.mxu0 %v637
      %v748 = vpop.f32.mrf.mxu0
      %v749 = vadd.f32 0.0, %v748
      %v750 = vpop.f32.mrf.mxu0
      %v751 = vpop.f32.mrf.mxu0
      %v752 = vadd.f32 0.0, %v751
      %v753 = vpop.f32.mrf.mxu0
      %754 = vdwg.mxu0
      %v755 = vadd.f32 %v563, %v725
      %v756 = vadd.f32 %v566, %v728
      %v757 = vadd.f32 %v571, %v733
      %v758 = vadd.f32 %v574, %v736
      %v759 = vadd.f32 %v579, %v741
      %v760 = vadd.f32 %v582, %v744
      %v761 = vadd.f32 %v587, %v749
      %v762 = vadd.f32 %v590, %v752
      %v763 = vld [vmem:[%s260] sm:$0x1]
      %v765 = vlaneseq
      %v766 = vshrl.u32 %v765, 7
      %v767 = vsub.s32 0, %v766
      %v768 = vrot.slane %v763, %v767
      %v770 = vadd.f32 %v755, %v768
      %v771 = vadd.f32 %v756, %v768
      %v772 = vadd.f32 %v757, %v768
      %v773 = vadd.f32 %v758, %v768
      %v774 = vadd.f32 %v759, %v768
      %v775 = vadd.f32 %v760, %v768
      %v776 = vadd.f32 %v761, %v768
      %v777 = vadd.f32 %v762, %v768
      %v778 = vmax.f32 %v770, 0.0
      %v779 = vmax.f32 %v771, 0.0
      %v780 = vmax.f32 %v772, 0.0
      %v781 = vmax.f32 %v773, 0.0
      %v782 = vmax.f32 %v774, 0.0
      %v783 = vmax.f32 %v775, 0.0
      %v784 = vmax.f32 %v776, 0.0
      %v785 = vmax.f32 %v777, 0.0
      %v786 = vpack.c.bf16 %v779, %v778
      %v787 = vpack.c.bf16 %v781, %v780
      %v788 = vpack.c.bf16 %v783, %v782
      %v789 = vpack.c.bf16 %v785, %v784
      %v794 = vunpack.c.l.b16 %v786
      %v795 = vunpack.c.h.b16 %v786
      %v796 = vunpack.c.l.b16 %v787
      %v797 = vunpack.c.h.b16 %v787
      %v798 = vunpack.c.l.b16 %v788
      %v799 = vunpack.c.h.b16 %v788
      %v800 = vunpack.c.l.b16 %v789
      %v801 = vunpack.c.h.b16 %v789
      %v802 = vpack.c.b16 %v794, %v794
      %v803 = vpack.c.b16 %v795, %v795
      %v804 = vpack.c.b16 %v796, %v796
      %v805 = vpack.c.b16 %v797, %v797
      %v806 = vpack.c.b16 %v798, %v798
      %v807 = vpack.c.b16 %v799, %v799
      %v808 = vpack.c.b16 %v800, %v800
      %v809 = vpack.c.b16 %v801, %v801
      %818 = vst [vmem:[%s268] sm:$0xf] %v802
      %819 = vst [vmem:[%s268 + $0x4] sm:$0xf] %v803
      %820 = vst [vmem:[%s268 + $0x8] sm:$0xf] %v804
      %821 = vst [vmem:[%s268 + $0xc] sm:$0xf] %v805
      %822 = vst [vmem:[%s268 + $0x10] sm:$0xf] %v806
      %823 = vst [vmem:[%s268 + $0x14] sm:$0xf] %v807
      %824 = vst [vmem:[%s268 + $0x18] sm:$0xf] %v808
      %825 = vst [vmem:[%s268 + $0x1c] sm:$0xf] %v809
      %p826 = scmp.lt.s32.totalorder %s19, 1
      %s827 = scalar_select %p826, %s19, 1
      %p828 = scmp.lt.s32.totalorder %s20, 0
      %s829 = scalar_select %p828, %s20, 0
      %s830 = smul.addr %s827, 8
      %s831 = sadd.s32 %s829, %s830
      %s832 = smul.addr %s831, 4
      %s833 = scalar_lea.vmem %s4, %s832
      // Predicated region
      $region37: #{basic_block_forward.2} parent=35 // pred_check
        %p834 = pneg %p151
      $region38: #{basic_block_forward.2} parent=35 // pred_check_branch
        %836 = sbr.rel (%p834) target = $region40
      $region39: #{basic_block_forward.2} parent=35 // pred_region
        _
      $region40: #{basic_block_forward.2} parent=35 // pred_fallthru
        _
    $region36: #{basic_block_forward.2} parent=5 // pred_fallthru
      _
    %p837 = scmp.le.s32.totalorder 2, %s10
    // Predicated region
    $region41: #{basic_block_forward.2} parent=5 // pred_check
      %p838 = pneg %p837
    $region42: #{basic_block_forward.2} parent=5 // pred_check_branch
      %840 = sbr.rel (%p838) target = $region44
    $region43: #{basic_block_forward.2} parent=5 // pred_region
      %s841 = ssub.s32 %s10, 2
      // Predicated region
      $region45: #{basic_block_forward.2} parent=43 // pred_check
        %p842 = pneg %p157
      $region46: #{basic_block_forward.2} parent=43 // pred_check_branch
        %844 = sbr.rel (%p842) target = $region48
      $region47: #{basic_block_forward.2} parent=43 // pred_region
        %p845 = scmp.lt.s32.totalorder %s21, 1
        %s846 = scalar_select %p845, %s21, 1
        %p847 = scmp.lt.s32.totalorder %s22, 0
        %s848 = scalar_select %p847, %s22, 0
        %s849 = smul.addr %s846, 8
        %s850 = sadd.s32 %s848, %s849
        %s851 = smul.addr %s850, 4
        %s852 = scalar_lea.vmem %s4, %s851
      $region48: #{basic_block_forward.2} parent=43 // pred_fallthru
        _
    $region44: #{basic_block_forward.2} parent=5 // pred_fallthru
      _
  $region6: #{basic_block_forward.2} parent=0 // loop_footer
    %s14 = sadd.s32 1, %s10
  $region7: #{basic_block_forward.2} parent=0 // loop_footer_branch
    %9 = sbr.rel target = $region3
  $region8: #{basic_block_forward.2} parent=0 // loop_exit
    _

// kernel: basic_block_forward.3
$region0: #{basic_block_forward.3}
  #allocation0 [shape = 'u32[]', space=smem, size = 0x4, offset = 0x4, fixed_abs, tag = 'smem constant byte address 0x4 - core index']
  #allocation1 [shape = 'u32[144,128]{1,0:T(1,128)}', space=vmem, size = 0x12000, scoped, tag = 'internal scratch']
  %s0 = inlined_call_operand.vmem [shape: bf16[2,80,128], index: 0, kind: input, shape index: {}]
  %s1 = inlined_call_operand.vmem [shape: bf16[3,128,128], index: 1, kind: input, shape index: {}]
  %s2 = inlined_call_operand.vmem [shape: f32[1,128], index: 2, kind: input, shape index: {}]
  %s3 = inlined_call_operand.vmem [shape: bf16[2,64,128], index: 3, kind: input, shape index: {}]
  %s4 = inlined_call_operand.vmem [shape: bf16[128,128], index: 4, kind: input, shape index: {}]
  %s5 = inlined_call_operand.vmem [shape: bf16[2,64,128], index: 5, kind: output, shape index: {}]
  %s6 = sld [smem:[#allocation0]]
  $region53: #{basic_block_forward.3} parent=0
    _
  %s8 = ssub.s32 1, %s6
  %s9 = scalar_select 0, %s8, %s6
  loop: start=0, step=1, limit=4
  $region2: #{basic_block_forward.3} parent=0 // loop_pre_header
    _
  $region3: #{basic_block_forward.3} parent=0 // loop_header
    %s11 = sphi 0, %s15
    %p12 = scmp.ge.s32.totalorder %s11, 4
    %s18 = sphi 0, %s30
    %s19 = sphi 0, %s26
    %s20 = sphi 0, %s18
    %s21 = sphi 0, %s19
    %s22 = sphi 0, %s20
    %s23 = sphi 0, %s21
    %s33 = sphi 0, %s35
    %s36 = sphi 0, %s33
    %s37 = sphi 0, %s36
    %s53 = sphi 0, %s37
    %s59 = sphi 0, %s61
    %s62 = sphi 0, %s59
    %s63 = sphi 0, %s62
    %s79 = sphi 0, %s63
    %s85 = sphi 0, %s87
    %s88 = sphi 0, %s85
    %s89 = sphi 0, %s88
    %s105 = sphi 0, %s89
    %s111 = sphi 0, %s113
    %s114 = sphi 0, %s111
    %s115 = sphi 0, %s114
    %s131 = sphi 0, %s115
    %s137 = sphi 0, %s139
    %s140 = sphi 0, %s137
    %s141 = sphi 0, %s140
    %s157 = sphi 0, %s141
    %s165 = sphi 0, %s167
    %s168 = sphi 0, %s165
    %s169 = sphi 0, %s168
    %s185 = sphi 0, %s169
  $region4: #{basic_block_forward.3} parent=0 // loop_header_branch
    %14 = sbr.rel (%p12) target = $region8
  $region5: #{basic_block_forward.3} parent=0 // loop_body
    %s16 = ssub.s32 %s11, 1
    %s17 = ssub.s32 %s11, 2
    %s24 = sadd.s32 1, %s19
    %p25 = scmp.ge.s32.totalorder %s24, 1
    %s26 = scalar_select %p25, 0, %s24
    %s27 = sadd.s32 1, %s18
    %s28 = scalar_select %p25, %s27, %s18
    %p29 = scmp.ge.s32.totalorder %s28, 2
    %s30 = scalar_select %p29, 0, %s28
    %s31 = ssub.s32 %s18, %s30
    %p32 = scmp.eq.s32.totalorder %s31, 0
    %s34 = sadd.s32 %s33, 1
    %s35 = scalar_select %p32, %s33, %s34
    %p38 = pneg %p32
    %p39 = scmp.eq.s32.totalorder %s11, 1
    %p40 = por %p38, %p39
    %p41 = scmp.ne.s32.totalorder %s33, %s36
    %p42 = scmp.eq.s32.totalorder %s11, 0
    %p43 = por %p41, %p42
    %p44 = scmp.ne.s32.totalorder %s33, %s36
    %p45 = scmp.eq.s32.totalorder %s16, 1
    %p46 = por %p44, %p45
    %p47 = scmp.ne.s32.totalorder %s36, %s37
    %p48 = scmp.eq.s32.totalorder %s16, 0
    %p49 = por %p47, %p48
    %p50 = scmp.ne.s32.totalorder %s36, %s37
    %p51 = scmp.eq.s32.totalorder %s17, 1
    %p52 = por %p50, %p51
    %p54 = scmp.ne.s32.totalorder %s37, %s53
    %p55 = scmp.eq.s32.totalorder %s17, 0
    %p56 = por %p54, %p55
    %s57 = ssub.s32 %s19, %s26
    %p58 = scmp.eq.s32.totalorder %s57, 0
    %s60 = sadd.s32 %s59, 1
    %s61 = scalar_select %p58, %s59, %s60
    %p64 = pneg %p58
    %p65 = scmp.eq.s32.totalorder %s11, 1
    %p66 = por %p64, %p65
    %p67 = scmp.ne.s32.totalorder %s59, %s62
    %p68 = scmp.eq.s32.totalorder %s11, 0
    %p69 = por %p67, %p68
    %p70 = scmp.ne.s32.totalorder %s59, %s62
    %p71 = scmp.eq.s32.totalorder %s16, 1
    %p72 = por %p70, %p71
    %p73 = scmp.ne.s32.totalorder %s62, %s63
    %p74 = scmp.eq.s32.totalorder %s16, 0
    %p75 = por %p73, %p74
    %p76 = scmp.ne.s32.totalorder %s62, %s63
    %p77 = scmp.eq.s32.totalorder %s17, 1
    %p78 = por %p76, %p77
    %p80 = scmp.ne.s32.totalorder %s63, %s79
    %p81 = scmp.eq.s32.totalorder %s17, 0
    %p82 = por %p80, %p81
    %s83 = ssub.s32 %s19, %s26
    %p84 = scmp.eq.s32.totalorder %s83, 0
    %s86 = sadd.s32 %s85, 1
    %s87 = scalar_select %p84, %s85, %s86
    %p90 = pneg %p84
    %p91 = scmp.eq.s32.totalorder %s11, 1
    %p92 = por %p90, %p91
    %p93 = scmp.ne.s32.totalorder %s85, %s88
    %p94 = scmp.eq.s32.totalorder %s11, 0
    %p95 = por %p93, %p94
    %p96 = scmp.ne.s32.totalorder %s85, %s88
    %p97 = scmp.eq.s32.totalorder %s16, 1
    %p98 = por %p96, %p97
    %p99 = scmp.ne.s32.totalorder %s88, %s89
    %p100 = scmp.eq.s32.totalorder %s16, 0
    %p101 = por %p99, %p100
    %p102 = scmp.ne.s32.totalorder %s88, %s89
    %p103 = scmp.eq.s32.totalorder %s17, 1
    %p104 = por %p102, %p103
    %p106 = scmp.ne.s32.totalorder %s89, %s105
    %p107 = scmp.eq.s32.totalorder %s17, 0
    %p108 = por %p106, %p107
    %s109 = ssub.s32 %s18, %s30
    %p110 = scmp.eq.s32.totalorder %s109, 0
    %s112 = sadd.s32 %s111, 1
    %s113 = scalar_select %p110, %s111, %s112
    %p116 = pneg %p110
    %p117 = scmp.eq.s32.totalorder %s11, 1
    %p118 = por %p116, %p117
    %p119 = scmp.ne.s32.totalorder %s111, %s114
    %p120 = scmp.eq.s32.totalorder %s11, 0
    %p121 = por %p119, %p120
    %p122 = scmp.ne.s32.totalorder %s111, %s114
    %p123 = scmp.eq.s32.totalorder %s16, 1
    %p124 = por %p122, %p123
    %p125 = scmp.ne.s32.totalorder %s114, %s115
    %p126 = scmp.eq.s32.totalorder %s16, 0
    %p127 = por %p125, %p126
    %p128 = scmp.ne.s32.totalorder %s114, %s115
    %p129 = scmp.eq.s32.totalorder %s17, 1
    %p130 = por %p128, %p129
    %p132 = scmp.ne.s32.totalorder %s115, %s131
    %p133 = scmp.eq.s32.totalorder %s17, 0
    %p134 = por %p132, %p133
    %s135 = ssub.s32 %s19, %s26
    %p136 = scmp.eq.s32.totalorder %s135, 0
    %s138 = sadd.s32 %s137, 1
    %s139 = scalar_select %p136, %s137, %s138
    %p142 = pneg %p136
    %p143 = scmp.eq.s32.totalorder %s11, 1
    %p144 = por %p142, %p143
    %p145 = scmp.ne.s32.totalorder %s137, %s140
    %p146 = scmp.eq.s32.totalorder %s11, 0
    %p147 = por %p145, %p146
    %p148 = scmp.ne.s32.totalorder %s137, %s140
    %p149 = scmp.eq.s32.totalorder %s16, 1
    %p150 = por %p148, %p149
    %p151 = scmp.ne.s32.totalorder %s140, %s141
    %p152 = scmp.eq.s32.totalorder %s16, 0
    %p153 = por %p151, %p152
    %p154 = scmp.ne.s32.totalorder %s140, %s141
    %p155 = scmp.eq.s32.totalorder %s17, 1
    %p156 = por %p154, %p155
    %p158 = scmp.ne.s32.totalorder %s141, %s157
    %p159 = scmp.eq.s32.totalorder %s17, 0
    %p160 = por %p158, %p159
    %s161 = ssub.s32 %s18, %s30
    %s162 = ssub.s32 %s19, %s26
    %s163 = sor.u32 %s161, %s162
    %p164 = scmp.eq.s32.totalorder %s163, 0
    %s166 = sadd.s32 %s165, 1
    %s167 = scalar_select %p164, %s165, %s166
    %p170 = pneg %p164
    %p171 = scmp.eq.s32.totalorder %s11, 1
    %p172 = por %p170, %p171
    %p173 = scmp.ne.s32.totalorder %s165, %s168
    %p174 = scmp.eq.s32.totalorder %s11, 0
    %p175 = por %p173, %p174
    %p176 = scmp.ne.s32.totalorder %s165, %s168
    %p177 = scmp.eq.s32.totalorder %s16, 1
    %p178 = por %p176, %p177
    %p179 = scmp.ne.s32.totalorder %s168, %s169
    %p180 = scmp.eq.s32.totalorder %s16, 0
    %p181 = por %p179, %p180
    %p182 = scmp.ne.s32.totalorder %s168, %s169
    %p183 = scmp.eq.s32.totalorder %s17, 1
    %p184 = por %p182, %p183
    %p186 = scmp.ne.s32.totalorder %s169, %s185
    %p187 = scmp.eq.s32.totalorder %s17, 0
    %p188 = por %p186, %p187
    %p189 = scmp.le.s32.totalorder 1, %s11
    %p190 = scmp.lt.s32.totalorder %s11, 3
    %p191 = pnand %p189, %p190
    %p192 = pneg %p191
    // Predicated region
    $region9: #{basic_block_forward.3} parent=5 // pred_check
      _
    $region10: #{basic_block_forward.3} parent=5 // pred_check_branch
      %194 = sbr.rel (%p191) target = $region12
    $region11: #{basic_block_forward.3} parent=5 // pred_region
      %s195 = ssub.s32 %s11, 1
      // Predicated region
      $region13: #{basic_block_forward.3} parent=11 // pred_check
        %p196 = pneg %p75
      $region14: #{basic_block_forward.3} parent=11 // pred_check_branch
        %198 = sbr.rel (%p196) target = $region16
      $region15: #{basic_block_forward.3} parent=11 // pred_region
        %p199 = scmp.lt.s32.totalorder %s21, 0
        %s200 = scalar_select %p199, %s21, 0
        %s201 = smul.addr %s200, 4
        %s202 = scalar_lea.vmem %s1, %s201
      $region16: #{basic_block_forward.3} parent=11 // pred_fallthru
        _
      // Predicated region
      $region17: #{basic_block_forward.3} parent=11 // pred_check
        %p203 = pneg %p101
      $region18: #{basic_block_forward.3} parent=11 // pred_check_branch
        %205 = sbr.rel (%p203) target = $region20
      $region19: #{basic_block_forward.3} parent=11 // pred_region
        %p206 = scmp.lt.s32.totalorder %s21, 0
        %s207 = scalar_select %p206, %s21, 0
        %s208 = scalar_lea.vmem %s2, %s207
      $region20: #{basic_block_forward.3} parent=11 // pred_fallthru
        _
      // Predicated region
      $region21: #{basic_block_forward.3} parent=11 // pred_check
        %p209 = pneg %p153
      $region22: #{basic_block_forward.3} parent=11 // pred_check_branch
        %211 = sbr.rel (%p209) target = $region24
      $region23: #{basic_block_forward.3} parent=11 // pred_region
        %p212 = scmp.lt.s32.totalorder %s21, 0
        %s213 = scalar_select %p212, %s21, 0
        %s214 = smul.addr %s213, 4
        %s215 = scalar_lea.vmem %s4, %s214
      $region24: #{basic_block_forward.3} parent=11 // pred_fallthru
        _
    $region12: #{basic_block_forward.3} parent=5 // pred_fallthru
      _
    %p216 = scmp.lt.s32.totalorder %s11, 2
    // Predicated region
    $region25: #{basic_block_forward.3} parent=5 // pred_check
      %p217 = pneg %p216
    $region26: #{basic_block_forward.3} parent=5 // pred_check_branch
      %219 = sbr.rel (%p217) target = $region28
    $region27: #{basic_block_forward.3} parent=5 // pred_region
      // Predicated region
      $region29: #{basic_block_forward.3} parent=27 // pred_check
        %p220 = pneg %p43
      $region30: #{basic_block_forward.3} parent=27 // pred_check_branch
        %222 = sbr.rel (%p220) target = $region32
      $region31: #{basic_block_forward.3} parent=27 // pred_region
        %p223 = scmp.lt.s32.totalorder %s18, 1
        %s224 = scalar_select %p223, %s18, 1
        %s225 = smul.addr %s224, 10
        %s226 = smul.addr %s225, 4
        %s227 = scalar_lea.vmem %s0, %s226
      $region32: #{basic_block_forward.3} parent=27 // pred_fallthru
        _
      // Predicated region
      $region33: #{basic_block_forward.3} parent=27 // pred_check
        %p228 = pneg %p121
      $region34: #{basic_block_forward.3} parent=27 // pred_check_branch
        %230 = sbr.rel (%p228) target = $region36
      $region35: #{basic_block_forward.3} parent=27 // pred_region
        %p231 = scmp.lt.s32.totalorder %s18, 1
        %s232 = scalar_select %p231, %s18, 1
        %s233 = smul.addr %s232, 8
        %s234 = smul.addr %s233, 4
        %s235 = scalar_lea.vmem %s3, %s234
      $region36: #{basic_block_forward.3} parent=27 // pred_fallthru
        _
    $region28: #{basic_block_forward.3} parent=5 // pred_fallthru
      _
    %p236 = scmp.le.s32.totalorder 1, %s11
    %p237 = scmp.lt.s32.totalorder %s11, 3
    %p238 = pnand %p236, %p237
    %p239 = pneg %p238
    // Predicated region
    $region37: #{basic_block_forward.3} parent=5 // pred_check
      _
    $region38: #{basic_block_forward.3} parent=5 // pred_check_branch
      %241 = sbr.rel (%p238) target = $region40
    $region39: #{basic_block_forward.3} parent=5 // pred_region
      %s242 = ssub.s32 %s11, 1
      %p243 = scmp.lt.s32.totalorder %s20, 1
      %s244 = scalar_select %p243, %s20, 1
      %s245 = smul.addr %s244, 10
      %s246 = smul.addr %s245, 4
      %s247 = scalar_lea.vmem %s0, %s246
      %p248 = pneg %p49
      %p249 = pneg %p46
      %p250 = scmp.lt.s32.totalorder %s21, 0
      %s251 = scalar_select %p250, %s21, 0
      %s252 = smul.addr %s251, 4
      %s253 = scalar_lea.vmem %s1, %s252
      %p254 = pneg %p75
      %p255 = pneg %p72
      %p256 = scmp.lt.s32.totalorder %s21, 0
      %s257 = scalar_select %p256, %s21, 0
      %s258 = scalar_lea.vmem %s2, %s257
      %p259 = pneg %p101
      %p260 = pneg %p98
      %p261 = scmp.lt.s32.totalorder %s20, 1
      %s262 = scalar_select %p261, %s20, 1
      %s263 = smul.addr %s262, 8
      %s264 = smul.addr %s263, 4
      %s265 = scalar_lea.vmem %s3, %s264
      %p266 = pneg %p127
      %p267 = pneg %p124
      %p268 = scmp.lt.s32.totalorder %s21, 0
      %s269 = scalar_select %p268, %s21, 0
      %s270 = smul.addr %s269, 4
      %s271 = scalar_lea.vmem %s4, %s270
      %p272 = pneg %p153
      %p273 = pneg %p150
      %p274 = pneg %p181
      %p275 = pneg %p178
      %p276 = scmp.lt.s32.totalorder %s20, 1
      %s277 = scalar_select %p276, %s20, 1
      %p278 = scmp.lt.s32.totalorder %s21, 0
      %s279 = scalar_select %p278, %s21, 0
      %s280 = smul.addr %s277, 8
      %s281 = sadd.s32 %s279, %s280
      %s282 = smul.addr %s281, 4
      %s283 = scalar_lea.vmem %s5, %s282
      %p284 = scmp.lt.s32.totalorder %s20, 1
      %s285 = scalar_select %p284, %s20, 1
      %s286 = smul.addr %s285, 10
      %s287 = smul.addr %s286, 4
      %s288 = scalar_lea.vmem %s0, %s287
      %p289 = scmp.lt.s32.totalorder %s21, 0
      %s290 = scalar_select %p289, %s21, 0
      %s291 = smul.addr %s290, 4
      %s292 = scalar_lea.vmem %s1, %s291
      %p293 = scmp.lt.s32.totalorder %s21, 0
      %s294 = scalar_select %p293, %s21, 0
      %s295 = scalar_lea.vmem %s2, %s294
      %p296 = scmp.lt.s32.totalorder %s20, 1
      %s297 = scalar_select %p296, %s20, 1
      %s298 = smul.addr %s297, 8
      %s299 = smul.addr %s298, 4
      %s300 = scalar_lea.vmem %s3, %s299
      %p301 = scmp.lt.s32.totalorder %s21, 0
      %s302 = scalar_select %p301, %s21, 0
      %s303 = smul.addr %s302, 4
      %s304 = scalar_lea.vmem %s4, %s303
      %p305 = scmp.lt.s32.totalorder %s20, 1
      %s306 = scalar_select %p305, %s20, 1
      %p307 = scmp.lt.s32.totalorder %s21, 0
      %s308 = scalar_select %p307, %s21, 0
      %s309 = smul.addr %s306, 8
      %s310 = sadd.s32 %s308, %s309
      %s311 = smul.addr %s310, 4
      %s312 = scalar_lea.vmem %s5, %s311
      %v314 = vld [vmem:[%s288] sm:$0xf]
      %v315 = vld [vmem:[%s288 + $0x4] sm:$0xf]
      %v316 = vld [vmem:[%s288 + $0x8] sm:$0xf]
      %v317 = vld [vmem:[%s288 + $0xc] sm:$0xf]
      %v318 = vld [vmem:[%s288 + $0x10] sm:$0xf]
      %v319 = vld [vmem:[%s288 + $0x14] sm:$0xf]
      %v320 = vld [vmem:[%s288 + $0x18] sm:$0xf]
      %v321 = vld [vmem:[%s288 + $0x1c] sm:$0xf]
      %v322 = vld [vmem:[%s292] sm:$0xf]
      %v323 = vld [vmem:[%s292 + $0x4] sm:$0xf]
      %v324 = vld [vmem:[%s292 + $0x8] sm:$0xf]
      %v325 = vld [vmem:[%s292 + $0xc] sm:$0xf]
      %v326 = vld [vmem:[%s292 + $0x10] sm:$0xf]
      %v327 = vld [vmem:[%s292 + $0x14] sm:$0xf]
      %v328 = vld [vmem:[%s292 + $0x18] sm:$0xf]
      %v329 = vld [vmem:[%s292 + $0x1c] sm:$0xf]
      %v330 = vld [vmem:[%s292 + $0x20] sm:$0xf]
      %v331 = vld [vmem:[%s292 + $0x24] sm:$0xf]
      %v332 = vld [vmem:[%s292 + $0x28] sm:$0xf]
      %v333 = vld [vmem:[%s292 + $0x2c] sm:$0xf]
      %v334 = vld [vmem:[%s292 + $0x30] sm:$0xf]
      %v335 = vld [vmem:[%s292 + $0x34] sm:$0xf]
      %v336 = vld [vmem:[%s292 + $0x38] sm:$0xf]
      %v337 = vld [vmem:[%s292 + $0x3c] sm:$0xf]
      %v338 = vld [vmem:[%s288 + $0x20] sm:$0xf]
      %s339 = scalar_lea.vmem %s292, 64
      %v340 = vld [vmem:[%s339] sm:$0xf]
      %v341 = vld [vmem:[%s339 + $0x4] sm:$0xf]
      %v342 = vld [vmem:[%s339 + $0x8] sm:$0xf]
      %v343 = vld [vmem:[%s339 + $0xc] sm:$0xf]
      %v344 = vld [vmem:[%s339 + $0x10] sm:$0xf]
      %v345 = vld [vmem:[%s339 + $0x14] sm:$0xf]
      %v346 = vld [vmem:[%s339 + $0x18] sm:$0xf]
      %v347 = vld [vmem:[%s339 + $0x1c] sm:$0xf]
      %v348 = vld [vmem:[%s339 + $0x20] sm:$0xf]
      %v349 = vld [vmem:[%s339 + $0x24] sm:$0xf]
      %v350 = vld [vmem:[%s339 + $0x28] sm:$0xf]
      %v351 = vld [vmem:[%s339 + $0x2c] sm:$0xf]
      %v352 = vld [vmem:[%s339 + $0x30] sm:$0xf]
      %v353 = vld [vmem:[%s339 + $0x34] sm:$0xf]
      %v354 = vld [vmem:[%s339 + $0x38] sm:$0xf]
      %v355 = vld [vmem:[%s339 + $0x3c] sm:$0xf]
      %v364 = vunpack.c.l.b16 %v315
      %v365 = vunpack.c.l.b16 %v316
      %v366 = vunpack.c.l.b16 %v317
      %v367 = vunpack.c.l.b16 %v318
      %v368 = vunpack.c.l.b16 %v319
      %v369 = vunpack.c.l.b16 %v320
      %v370 = vunpack.c.l.b16 %v321
      %v371 = vunpack.c.l.b16 %v338
      %v372 = vpack.c.b16 %v365, %v364
      %v373 = vpack.c.b16 %v367, %v366
      %v374 = vpack.c.b16 %v369, %v368
      %v375 = vpack.c.b16 %v371, %v370
      %v396 = vunpack.c.l.b16 %v340
      %v397 = vunpack.c.l.b16 %v341
      %v398 = vunpack.c.l.b16 %v342
      %v399 = vunpack.c.l.b16 %v343
      %v400 = vunpack.c.l.b16 %v344
      %v401 = vunpack.c.l.b16 %v345
      %v402 = vunpack.c.l.b16 %v346
      %v403 = vunpack.c.l.b16 %v347
      %v404 = vunpack.c.l.b16 %v348
      %v405 = vunpack.c.l.b16 %v349
      %v406 = vunpack.c.l.b16 %v350
      %v407 = vunpack.c.l.b16 %v351
      %v408 = vunpack.c.l.b16 %v352
      %v409 = vunpack.c.l.b16 %v353
      %v410 = vunpack.c.l.b16 %v354
      %v411 = vunpack.c.l.b16 %v355
      %v412 = vpack.c.b16 %v397, %v396
      %v413 = vpack.c.b16 %v399, %v398
      %v414 = vpack.c.b16 %v401, %v400
      %v415 = vpack.c.b16 %v403, %v402
      %v416 = vpack.c.b16 %v405, %v404
      %v417 = vpack.c.b16 %v407, %v406
      %v418 = vpack.c.b16 %v409, %v408
      %v419 = vpack.c.b16 %v411, %v410
      %428 = vmatprep.subr.bf16.mxu0 0
      %429 = vmatpush1.bf16.msra.mxu0 %v419
      %430 = vmatprep.subr.bf16.mxu0 0
      %431 = vmatpush1.bf16.msra.mxu0 %v418
      %432 = vmatprep.subr.bf16.mxu0 0
      %433 = vmatpush1.bf16.msra.mxu0 %v417
      %434 = vmatprep.subr.bf16.mxu0 0
      %435 = vmatpush1.bf16.msra.mxu0 %v416
      %436 = vmatprep.subr.bf16.mxu0 0
      %437 = vmatpush1.bf16.msra.mxu0 %v415
      %438 = vmatprep.subr.bf16.mxu0 0
      %439 = vmatpush1.bf16.msra.mxu0 %v414
      %440 = vmatprep.subr.bf16.mxu0 0
      %441 = vmatpush1.bf16.msra.mxu0 %v413
      %442 = vmatprep.subr.bf16.mxu0 0
      %443 = vmatpush1.bf16.msra.mxu0 %v412
      %444 = vmatprep.subr.bf16.mxu0 0
      %445 = vmatpush2.bf16.msra.mxu0 0
      %446 = vmatprep.subr.bf16.mxu0 0
      %447 = vmatpush2.bf16.msra.mxu0 0
      %448 = vmatprep.subr.bf16.mxu0 0
      %449 = vmatpush2.bf16.msra.mxu0 0
      %450 = vmatprep.subr.bf16.mxu0 0
      %451 = vmatpush2.bf16.msra.mxu0 0
      %452 = vmatprep.subr.bf16.mxu0 0
      %453 = vmatpush2.bf16.msra.mxu0 0
      %454 = vmatprep.subr.bf16.mxu0 0
      %455 = vmatpush2.bf16.msra.mxu0 0
      %456 = vmatprep.subr.bf16.mxu0 0
      %457 = vmatpush2.bf16.msra.mxu0 0
      %458 = vmatprep.subr.bf16.mxu0 0
      %459 = vmatpush2.bf16.msra.mxu0 0
      %460 = vmatprep.mubr.bf16.mxu0 0
      %461 = vmatmul.mubr.bf16.gmra.mxu0 %v372
      %v462 = vpop.f32.mrf.mxu0
      %v463 = vadd.f32 0.0, %v462
      %v464 = vpop.f32.mrf.mxu0
      %v465 = vpop.f32.mrf.mxu0
      %v466 = vadd.f32 0.0, %v465
      %v467 = vpop.f32.mrf.mxu0
      %468 = vmatprep.mubr.bf16.mxu0 0
      %469 = vmatmul.mubr.bf16.gmra.mxu0 %v373
      %v470 = vpop.f32.mrf.mxu0
      %v471 = vadd.f32 0.0, %v470
      %v472 = vpop.f32.mrf.mxu0
      %v473 = vpop.f32.mrf.mxu0
      %v474 = vadd.f32 0.0, %v473
      %v475 = vpop.f32.mrf.mxu0
      %476 = vmatprep.mubr.bf16.mxu0 0
      %477 = vmatmul.mubr.bf16.gmra.mxu0 %v374
      %v478 = vpop.f32.mrf.mxu0
      %v479 = vadd.f32 0.0, %v478
      %v480 = vpop.f32.mrf.mxu0
      %v481 = vpop.f32.mrf.mxu0
      %v482 = vadd.f32 0.0, %v481
      %v483 = vpop.f32.mrf.mxu0
      %484 = vmatprep.mubr.bf16.mxu0 0
      %485 = vmatmul.mubr.bf16.gmra.mxu0 %v375
      %v486 = vpop.f32.mrf.mxu0
      %v487 = vadd.f32 0.0, %v486
      %v488 = vpop.f32.mrf.mxu0
      %v489 = vpop.f32.mrf.mxu0
      %v490 = vadd.f32 0.0, %v489
      %v491 = vpop.f32.mrf.mxu0
      %492 = vdwg.mxu0
      %v494 = vunpack.c.l.b16 %v314
      %v495 = vpack.c.b16 %v364, %v494
      %v496 = vpack.c.b16 %v366, %v365
      %v497 = vpack.c.b16 %v368, %v367
      %v498 = vpack.c.b16 %v370, %v369
      %v519 = vunpack.c.l.b16 %v322
      %v520 = vunpack.c.l.b16 %v323
      %v521 = vunpack.c.l.b16 %v324
      %v522 = vunpack.c.l.b16 %v325
      %v523 = vunpack.c.l.b16 %v326
      %v524 = vunpack.c.l.b16 %v327
      %v525 = vunpack.c.l.b16 %v328
      %v526 = vunpack.c.l.b16 %v329
      %v527 = vunpack.c.l.b16 %v330
      %v528 = vunpack.c.l.b16 %v331
      %v529 = vunpack.c.l.b16 %v332
      %v530 = vunpack.c.l.b16 %v333
      %v531 = vunpack.c.l.b16 %v334
      %v532 = vunpack.c.l.b16 %v335
      %v533 = vunpack.c.l.b16 %v336
      %v534 = vunpack.c.l.b16 %v337
      %v535 = vpack.c.b16 %v520, %v519
      %v536 = vpack.c.b16 %v522, %v521
      %v537 = vpack.c.b16 %v524, %v523
      %v538 = vpack.c.b16 %v526, %v525
      %v539 = vpack.c.b16 %v528, %v527
      %v540 = vpack.c.b16 %v530, %v529
      %v541 = vpack.c.b16 %v532, %v531
      %v542 = vpack.c.b16 %v534, %v533
      %551 = vmatprep.subr.bf16.mxu0 0
      %552 = vmatpush1.bf16.msra.mxu0 %v542
      %553 = vmatprep.subr.bf16.mxu0 0
      %554 = vmatpush1.bf16.msra.mxu0 %v541
      %555 = vmatprep.subr.bf16.mxu0 0
      %556 = vmatpush1.bf16.msra.mxu0 %v540
      %557 = vmatprep.subr.bf16.mxu0 0
      %558 = vmatpush1.bf16.msra.mxu0 %v539
      %559 = vmatprep.subr.bf16.mxu0 0
      %560 = vmatpush1.bf16.msra.mxu0 %v538
      %561 = vmatprep.subr.bf16.mxu0 0
      %562 = vmatpush1.bf16.msra.mxu0 %v537
      %563 = vmatprep.subr.bf16.mxu0 0
      %564 = vmatpush1.bf16.msra.mxu0 %v536
      %565 = vmatprep.subr.bf16.mxu0 0
      %566 = vmatpush1.bf16.msra.mxu0 %v535
      %567 = vmatprep.subr.bf16.mxu0 0
      %568 = vmatpush2.bf16.msra.mxu0 0
      %569 = vmatprep.subr.bf16.mxu0 0
      %570 = vmatpush2.bf16.msra.mxu0 0
      %571 = vmatprep.subr.bf16.mxu0 0
      %572 = vmatpush2.bf16.msra.mxu0 0
      %573 = vmatprep.subr.bf16.mxu0 0
      %574 = vmatpush2.bf16.msra.mxu0 0
      %575 = vmatprep.subr.bf16.mxu0 0
      %576 = vmatpush2.bf16.msra.mxu0 0
      %577 = vmatprep.subr.bf16.mxu0 0
      %578 = vmatpush2.bf16.msra.mxu0 0
      %579 = vmatprep.subr.bf16.mxu0 0
      %580 = vmatpush2.bf16.msra.mxu0 0
      %581 = vmatprep.subr.bf16.mxu0 0
      %582 = vmatpush2.bf16.msra.mxu0 0
      %583 = vmatprep.mubr.bf16.mxu0 0
      %584 = vmatmul.mubr.bf16.gmra.mxu0 %v495
      %v585 = vpop.f32.mrf.mxu0
      %v586 = vadd.f32 %v463, %v585
      %v587 = vpop.f32.mrf.mxu0
      %v588 = vpop.f32.mrf.mxu0
      %v589 = vadd.f32 %v466, %v588
      %v590 = vpop.f32.mrf.mxu0
      %591 = vmatprep.mubr.bf16.mxu0 0
      %592 = vmatmul.mubr.bf16.gmra.mxu0 %v496
      %v593 = vpop.f32.mrf.mxu0
      %v594 = vadd.f32 %v471, %v593
      %v595 = vpop.f32.mrf.mxu0
      %v596 = vpop.f32.mrf.mxu0
      %v597 = vadd.f32 %v474, %v596
      %v598 = vpop.f32.mrf.mxu0
      %599 = vmatprep.mubr.bf16.mxu0 0
      %600 = vmatmul.mubr.bf16.gmra.mxu0 %v497
      %v601 = vpop.f32.mrf.mxu0
      %v602 = vadd.f32 %v479, %v601
      %v603 = vpop.f32.mrf.mxu0
      %v604 = vpop.f32.mrf.mxu0
      %v605 = vadd.f32 %v482, %v604
      %v606 = vpop.f32.mrf.mxu0
      %607 = vmatprep.mubr.bf16.mxu0 0
      %608 = vmatmul.mubr.bf16.gmra.mxu0 %v498
      %v609 = vpop.f32.mrf.mxu0
      %v610 = vadd.f32 %v487, %v609
      %v611 = vpop.f32.mrf.mxu0
      %v612 = vpop.f32.mrf.mxu0
      %v613 = vadd.f32 %v490, %v612
      %v614 = vpop.f32.mrf.mxu0
      %615 = vdwg.mxu0
      %v616 = vld [vmem:[%s288 + $0x8] sm:$0xf]
      %v617 = vld [vmem:[%s288 + $0xc] sm:$0xf]
      %v618 = vld [vmem:[%s288 + $0x10] sm:$0xf]
      %v619 = vld [vmem:[%s288 + $0x14] sm:$0xf]
      %v620 = vld [vmem:[%s288 + $0x18] sm:$0xf]
      %v621 = vld [vmem:[%s288 + $0x1c] sm:$0xf]
      %v622 = vld [vmem:[%s288 + $0x20] sm:$0xf]
      %v623 = vld [vmem:[%s288 + $0x24] sm:$0xf]
      %s624 = scalar_lea.vmem %s292, 128
      %v625 = vld [vmem:[%s624] sm:$0xf]
      %v626 = vld [vmem:[%s624 + $0x4] sm:$0xf]
      %v627 = vld [vmem:[%s624 + $0x8] sm:$0xf]
      %v628 = vld [vmem:[%s624 + $0xc] sm:$0xf]
      %v629 = vld [vmem:[%s624 + $0x10] sm:$0xf]
      %v630 = vld [vmem:[%s624 + $0x14] sm:$0xf]
      %v631 = vld [vmem:[%s624 + $0x18] sm:$0xf]
      %v632 = vld [vmem:[%s624 + $0x1c] sm:$0xf]
      %v633 = vld [vmem:[%s624 + $0x20] sm:$0xf]
      %v634 = vld [vmem:[%s624 + $0x24] sm:$0xf]
      %v635 = vld [vmem:[%s624 + $0x28] sm:$0xf]
      %v636 = vld [vmem:[%s624 + $0x2c] sm:$0xf]
      %v637 = vld [vmem:[%s624 + $0x30] sm:$0xf]
      %v638 = vld [vmem:[%s624 + $0x34] sm:$0xf]
      %v639 = vld [vmem:[%s624 + $0x38] sm:$0xf]
      %v640 = vld [vmem:[%s624 + $0x3c] sm:$0xf]
      %v649 = vunpack.c.l.b16 %v616
      %v650 = vunpack.c.l.b16 %v617
      %v651 = vunpack.c.l.b16 %v618
      %v652 = vunpack.c.l.b16 %v619
      %v653 = vunpack.c.l.b16 %v620
      %v654 = vunpack.c.l.b16 %v621
      %v655 = vunpack.c.l.b16 %v622
      %v656 = vunpack.c.l.b16 %v623
      %v657 = vpack.c.b16 %v650, %v649
      %v658 = vpack.c.b16 %v652, %v651
      %v659 = vpack.c.b16 %v654, %v653
      %v660 = vpack.c.b16 %v656, %v655
      %v681 = vunpack.c.l.b16 %v625
      %v682 = vunpack.c.l.b16 %v626
      %v683 = vunpack.c.l.b16 %v627
      %v684 = vunpack.c.l.b16 %v628
      %v685 = vunpack.c.l.b16 %v629
      %v686 = vunpack.c.l.b16 %v630
      %v687 = vunpack.c.l.b16 %v631
      %v688 = vunpack.c.l.b16 %v632
      %v689 = vunpack.c.l.b16 %v633
      %v690 = vunpack.c.l.b16 %v634
      %v691 = vunpack.c.l.b16 %v635
      %v692 = vunpack.c.l.b16 %v636
      %v693 = vunpack.c.l.b16 %v637
      %v694 = vunpack.c.l.b16 %v638
      %v695 = vunpack.c.l.b16 %v639
      %v696 = vunpack.c.l.b16 %v640
      %v697 = vpack.c.b16 %v682, %v681
      %v698 = vpack.c.b16 %v684, %v683
      %v699 = vpack.c.b16 %v686, %v685
      %v700 = vpack.c.b16 %v688, %v687
      %v701 = vpack.c.b16 %v690, %v689
      %v702 = vpack.c.b16 %v692, %v691
      %v703 = vpack.c.b16 %v694, %v693
      %v704 = vpack.c.b16 %v696, %v695
      %713 = vmatprep.subr.bf16.mxu0 0
      %714 = vmatpush1.bf16.msra.mxu0 %v704
      %715 = vmatprep.subr.bf16.mxu0 0
      %716 = vmatpush1.bf16.msra.mxu0 %v703
      %717 = vmatprep.subr.bf16.mxu0 0
      %718 = vmatpush1.bf16.msra.mxu0 %v702
      %719 = vmatprep.subr.bf16.mxu0 0
      %720 = vmatpush1.bf16.msra.mxu0 %v701
      %721 = vmatprep.subr.bf16.mxu0 0
      %722 = vmatpush1.bf16.msra.mxu0 %v700
      %723 = vmatprep.subr.bf16.mxu0 0
      %724 = vmatpush1.bf16.msra.mxu0 %v699
      %725 = vmatprep.subr.bf16.mxu0 0
      %726 = vmatpush1.bf16.msra.mxu0 %v698
      %727 = vmatprep.subr.bf16.mxu0 0
      %728 = vmatpush1.bf16.msra.mxu0 %v697
      %729 = vmatprep.subr.bf16.mxu0 0
      %730 = vmatpush2.bf16.msra.mxu0 0
      %731 = vmatprep.subr.bf16.mxu0 0
      %732 = vmatpush2.bf16.msra.mxu0 0
      %733 = vmatprep.subr.bf16.mxu0 0
      %734 = vmatpush2.bf16.msra.mxu0 0
      %735 = vmatprep.subr.bf16.mxu0 0
      %736 = vmatpush2.bf16.msra.mxu0 0
      %737 = vmatprep.subr.bf16.mxu0 0
      %738 = vmatpush2.bf16.msra.mxu0 0
      %739 = vmatprep.subr.bf16.mxu0 0
      %740 = vmatpush2.bf16.msra.mxu0 0
      %741 = vmatprep.subr.bf16.mxu0 0
      %742 = vmatpush2.bf16.msra.mxu0 0
      %743 = vmatprep.subr.bf16.mxu0 0
      %744 = vmatpush2.bf16.msra.mxu0 0
      %745 = vmatprep.mubr.bf16.mxu0 0
      %746 = vmatmul.mubr.bf16.gmra.mxu0 %v657
      %v747 = vpop.f32.mrf.mxu0
      %v748 = vadd.f32 0.0, %v747
      %v749 = vpop.f32.mrf.mxu0
      %v750 = vpop.f32.mrf.mxu0
      %v751 = vadd.f32 0.0, %v750
      %v752 = vpop.f32.mrf.mxu0
      %753 = vmatprep.mubr.bf16.mxu0 0
      %754 = vmatmul.mubr.bf16.gmra.mxu0 %v658
      %v755 = vpop.f32.mrf.mxu0
      %v756 = vadd.f32 0.0, %v755
      %v757 = vpop.f32.mrf.mxu0
      %v758 = vpop.f32.mrf.mxu0
      %v759 = vadd.f32 0.0, %v758
      %v760 = vpop.f32.mrf.mxu0
      %761 = vmatprep.mubr.bf16.mxu0 0
      %762 = vmatmul.mubr.bf16.gmra.mxu0 %v659
      %v763 = vpop.f32.mrf.mxu0
      %v764 = vadd.f32 0.0, %v763
      %v765 = vpop.f32.mrf.mxu0
      %v766 = vpop.f32.mrf.mxu0
      %v767 = vadd.f32 0.0, %v766
      %v768 = vpop.f32.mrf.mxu0
      %769 = vmatprep.mubr.bf16.mxu0 0
      %770 = vmatmul.mubr.bf16.gmra.mxu0 %v660
      %v771 = vpop.f32.mrf.mxu0
      %v772 = vadd.f32 0.0, %v771
      %v773 = vpop.f32.mrf.mxu0
      %v774 = vpop.f32.mrf.mxu0
      %v775 = vadd.f32 0.0, %v774
      %v776 = vpop.f32.mrf.mxu0
      %777 = vdwg.mxu0
      %v778 = vadd.f32 %v586, %v748
      %v779 = vadd.f32 %v589, %v751
      %v780 = vadd.f32 %v594, %v756
      %v781 = vadd.f32 %v597, %v759
      %v782 = vadd.f32 %v602, %v764
      %v783 = vadd.f32 %v605, %v767
      %v784 = vadd.f32 %v610, %v772
      %v785 = vadd.f32 %v613, %v775
      %v786 = vld [vmem:[%s300] sm:$0xf]
      %v787 = vld [vmem:[%s300 + $0x4] sm:$0xf]
      %v788 = vld [vmem:[%s300 + $0x8] sm:$0xf]
      %v789 = vld [vmem:[%s300 + $0xc] sm:$0xf]
      %v790 = vld [vmem:[%s300 + $0x10] sm:$0xf]
      %v791 = vld [vmem:[%s300 + $0x14] sm:$0xf]
      %v792 = vld [vmem:[%s300 + $0x18] sm:$0xf]
      %v793 = vld [vmem:[%s300 + $0x1c] sm:$0xf]
      %v794 = vld [vmem:[%s304] sm:$0xf]
      %v795 = vld [vmem:[%s304 + $0x4] sm:$0xf]
      %v796 = vld [vmem:[%s304 + $0x8] sm:$0xf]
      %v797 = vld [vmem:[%s304 + $0xc] sm:$0xf]
      %v798 = vld [vmem:[%s304 + $0x10] sm:$0xf]
      %v799 = vld [vmem:[%s304 + $0x14] sm:$0xf]
      %v800 = vld [vmem:[%s304 + $0x18] sm:$0xf]
      %v801 = vld [vmem:[%s304 + $0x1c] sm:$0xf]
      %v802 = vld [vmem:[%s304 + $0x20] sm:$0xf]
      %v803 = vld [vmem:[%s304 + $0x24] sm:$0xf]
      %v804 = vld [vmem:[%s304 + $0x28] sm:$0xf]
      %v805 = vld [vmem:[%s304 + $0x2c] sm:$0xf]
      %v806 = vld [vmem:[%s304 + $0x30] sm:$0xf]
      %v807 = vld [vmem:[%s304 + $0x34] sm:$0xf]
      %v808 = vld [vmem:[%s304 + $0x38] sm:$0xf]
      %v809 = vld [vmem:[%s304 + $0x3c] sm:$0xf]
      %v818 = vunpack.c.l.b16 %v786
      %v819 = vunpack.c.l.b16 %v787
      %v820 = vunpack.c.l.b16 %v788
      %v821 = vunpack.c.l.b16 %v789
      %v822 = vunpack.c.l.b16 %v790
      %v823 = vunpack.c.l.b16 %v791
      %v824 = vunpack.c.l.b16 %v792
      %v825 = vunpack.c.l.b16 %v793
      %v826 = vpack.c.b16 %v819, %v818
      %v827 = vpack.c.b16 %v821, %v820
      %v828 = vpack.c.b16 %v823, %v822
      %v829 = vpack.c.b16 %v825, %v824
      %v850 = vunpack.c.l.b16 %v794
      %v851 = vunpack.c.l.b16 %v795
      %v852 = vunpack.c.l.b16 %v796
      %v853 = vunpack.c.l.b16 %v797
      %v854 = vunpack.c.l.b16 %v798
      %v855 = vunpack.c.l.b16 %v799
      %v856 = vunpack.c.l.b16 %v800
      %v857 = vunpack.c.l.b16 %v801
      %v858 = vunpack.c.l.b16 %v802
      %v859 = vunpack.c.l.b16 %v803
      %v860 = vunpack.c.l.b16 %v804
      %v861 = vunpack.c.l.b16 %v805
      %v862 = vunpack.c.l.b16 %v806
      %v863 = vunpack.c.l.b16 %v807
      %v864 = vunpack.c.l.b16 %v808
      %v865 = vunpack.c.l.b16 %v809
      %v866 = vpack.c.b16 %v851, %v850
      %v867 = vpack.c.b16 %v853, %v852
      %v868 = vpack.c.b16 %v855, %v854
      %v869 = vpack.c.b16 %v857, %v856
      %v870 = vpack.c.b16 %v859, %v858
      %v871 = vpack.c.b16 %v861, %v860
      %v872 = vpack.c.b16 %v863, %v862
      %v873 = vpack.c.b16 %v865, %v864
      %882 = vmatprep.subr.bf16.mxu0 0
      %883 = vmatpush1.bf16.msra.mxu0 %v873
      %884 = vmatprep.subr.bf16.mxu0 0
      %885 = vmatpush1.bf16.msra.mxu0 %v872
      %886 = vmatprep.subr.bf16.mxu0 0
      %887 = vmatpush1.bf16.msra.mxu0 %v871
      %888 = vmatprep.subr.bf16.mxu0 0
      %889 = vmatpush1.bf16.msra.mxu0 %v870
      %890 = vmatprep.subr.bf16.mxu0 0
      %891 = vmatpush1.bf16.msra.mxu0 %v869
      %892 = vmatprep.subr.bf16.mxu0 0
      %893 = vmatpush1.bf16.msra.mxu0 %v868
      %894 = vmatprep.subr.bf16.mxu0 0
      %895 = vmatpush1.bf16.msra.mxu0 %v867
      %896 = vmatprep.subr.bf16.mxu0 0
      %897 = vmatpush1.bf16.msra.mxu0 %v866
      %898 = vmatprep.subr.bf16.mxu0 0
      %899 = vmatpush2.bf16.msra.mxu0 0
      %900 = vmatprep.subr.bf16.mxu0 0
      %901 = vmatpush2.bf16.msra.mxu0 0
      %902 = vmatprep.subr.bf16.mxu0 0
      %903 = vmatpush2.bf16.msra.mxu0 0
      %904 = vmatprep.subr.bf16.mxu0 0
      %905 = vmatpush2.bf16.msra.mxu0 0
      %906 = vmatprep.subr.bf16.mxu0 0
      %907 = vmatpush2.bf16.msra.mxu0 0
      %908 = vmatprep.subr.bf16.mxu0 0
      %909 = vmatpush2.bf16.msra.mxu0 0
      %910 = vmatprep.subr.bf16.mxu0 0
      %911 = vmatpush2.bf16.msra.mxu0 0
      %912 = vmatprep.subr.bf16.mxu0 0
      %913 = vmatpush2.bf16.msra.mxu0 0
      %914 = vmatprep.mubr.bf16.mxu0 0
      %915 = vmatmul.mubr.bf16.gmra.mxu0 %v826
      %v916 = vpop.f32.mrf.mxu0
      %v917 = vadd.f32 0.0, %v916
      %v918 = vpop.f32.mrf.mxu0
      %v919 = vpop.f32.mrf.mxu0
      %v920 = vadd.f32 0.0, %v919
      %v921 = vpop.f32.mrf.mxu0
      %922 = vmatprep.mubr.bf16.mxu0 0
      %923 = vmatmul.mubr.bf16.gmra.mxu0 %v827
      %v924 = vpop.f32.mrf.mxu0
      %v925 = vadd.f32 0.0, %v924
      %v926 = vpop.f32.mrf.mxu0
      %v927 = vpop.f32.mrf.mxu0
      %v928 = vadd.f32 0.0, %v927
      %v929 = vpop.f32.mrf.mxu0
      %930 = vmatprep.mubr.bf16.mxu0 0
      %931 = vmatmul.mubr.bf16.gmra.mxu0 %v828
      %v932 = vpop.f32.mrf.mxu0
      %v933 = vadd.f32 0.0, %v932
      %v934 = vpop.f32.mrf.mxu0
      %v935 = vpop.f32.mrf.mxu0
      %v936 = vadd.f32 0.0, %v935
      %v937 = vpop.f32.mrf.mxu0
      %938 = vmatprep.mubr.bf16.mxu0 0
      %939 = vmatmul.mubr.bf16.gmra.mxu0 %v829
      %v940 = vpop.f32.mrf.mxu0
      %v941 = vadd.f32 0.0, %v940
      %v942 = vpop.f32.mrf.mxu0
      %v943 = vpop.f32.mrf.mxu0
      %v944 = vadd.f32 0.0, %v943
      %v945 = vpop.f32.mrf.mxu0
      %946 = vdwg.mxu0
      %v947 = vadd.f32 %v778, %v917
      %v948 = vadd.f32 %v779, %v920
      %v949 = vadd.f32 %v780, %v925
      %v950 = vadd.f32 %v781, %v928
      %v951 = vadd.f32 %v782, %v933
      %v952 = vadd.f32 %v783, %v936
      %v953 = vadd.f32 %v784, %v941
      %v954 = vadd.f32 %v785, %v944
      %v955 = vld [vmem:[%s295] sm:$0x1]
      %v957 = vlaneseq
      %v958 = vshrl.u32 %v957, 7
      %v959 = vsub.s32 0, %v958
      %v960 = vrot.slane %v955, %v959
      %v962 = vadd.f32 %v947, %v960
      %v963 = vadd.f32 %v948, %v960
      %v964 = vadd.f32 %v949, %v960
      %v965 = vadd.f32 %v950, %v960
      %v966 = vadd.f32 %v951, %v960
      %v967 = vadd.f32 %v952, %v960
      %v968 = vadd.f32 %v953, %v960
      %v969 = vadd.f32 %v954, %v960
      %v970 = vmax.f32 %v962, 0.0
      %v971 = vmax.f32 %v963, 0.0
      %v972 = vmax.f32 %v964, 0.0
      %v973 = vmax.f32 %v965, 0.0
      %v974 = vmax.f32 %v966, 0.0
      %v975 = vmax.f32 %v967, 0.0
      %v976 = vmax.f32 %v968, 0.0
      %v977 = vmax.f32 %v969, 0.0
      %v978 = vpack.c.bf16 %v971, %v970
      %v979 = vpack.c.bf16 %v973, %v972
      %v980 = vpack.c.bf16 %v975, %v974
      %v981 = vpack.c.bf16 %v977, %v976
      %v986 = vunpack.c.l.b16 %v978
      %v987 = vunpack.c.h.b16 %v978
      %v988 = vunpack.c.l.b16 %v979
      %v989 = vunpack.c.h.b16 %v979
      %v990 = vunpack.c.l.b16 %v980
      %v991 = vunpack.c.h.b16 %v980
      %v992 = vunpack.c.l.b16 %v981
      %v993 = vunpack.c.h.b16 %v981
      %v994 = vpack.c.b16 %v986, %v986
      %v995 = vpack.c.b16 %v987, %v987
      %v996 = vpack.c.b16 %v988, %v988
      %v997 = vpack.c.b16 %v989, %v989
      %v998 = vpack.c.b16 %v990, %v990
      %v999 = vpack.c.b16 %v991, %v991
      %v1000 = vpack.c.b16 %v992, %v992
      %v1001 = vpack.c.b16 %v993, %v993
      %1010 = vst [vmem:[%s312] sm:$0xf] %v994
      %1011 = vst [vmem:[%s312 + $0x4] sm:$0xf] %v995
      %1012 = vst [vmem:[%s312 + $0x8] sm:$0xf] %v996
      %1013 = vst [vmem:[%s312 + $0xc] sm:$0xf] %v997
      %1014 = vst [vmem:[%s312 + $0x10] sm:$0xf] %v998
      %1015 = vst [vmem:[%s312 + $0x14] sm:$0xf] %v999
      %1016 = vst [vmem:[%s312 + $0x18] sm:$0xf] %v1000
      %1017 = vst [vmem:[%s312 + $0x1c] sm:$0xf] %v1001
      %p1018 = scmp.lt.s32.totalorder %s20, 1
      %s1019 = scalar_select %p1018, %s20, 1
      %p1020 = scmp.lt.s32.totalorder %s21, 0
      %s1021 = scalar_select %p1020, %s21, 0
      %s1022 = smul.addr %s1019, 8
      %s1023 = sadd.s32 %s1021, %s1022
      %s1024 = smul.addr %s1023, 4
      %s1025 = scalar_lea.vmem %s5, %s1024
      // Predicated region
      $region41: #{basic_block_forward.3} parent=39 // pred_check
        %p1026 = pneg %p178
      $region42: #{basic_block_forward.3} parent=39 // pred_check_branch
        %1028 = sbr.rel (%p1026) target = $region44
      $region43: #{basic_block_forward.3} parent=39 // pred_region
        _
      $region44: #{basic_block_forward.3} parent=39 // pred_fallthru
        _
    $region40: #{basic_block_forward.3} parent=5 // pred_fallthru
      _
    %p1029 = scmp.le.s32.totalorder 2, %s11
    // Predicated region
    $region45: #{basic_block_forward.3} parent=5 // pred_check
      %p1030 = pneg %p1029
    $region46: #{basic_block_forward.3} parent=5 // pred_check_branch
      %1032 = sbr.rel (%p1030) target = $region48
    $region47: #{basic_block_forward.3} parent=5 // pred_region
      %s1033 = ssub.s32 %s11, 2
      // Predicated region
      $region49: #{basic_block_forward.3} parent=47 // pred_check
        %p1034 = pneg %p184
      $region50: #{basic_block_forward.3} parent=47 // pred_check_branch
        %1036 = sbr.rel (%p1034) target = $region52
      $region51: #{basic_block_forward.3} parent=47 // pred_region
        %p1037 = scmp.lt.s32.totalorder %s22, 1
        %s1038 = scalar_select %p1037, %s22, 1
        %p1039 = scmp.lt.s32.totalorder %s23, 0
        %s1040 = scalar_select %p1039, %s23, 0
        %s1041 = smul.addr %s1038, 8
        %s1042 = sadd.s32 %s1040, %s1041
        %s1043 = smul.addr %s1042, 4
        %s1044 = scalar_lea.vmem %s5, %s1043
      $region52: #{basic_block_forward.3} parent=47 // pred_fallthru
        _
    $region48: #{basic_block_forward.3} parent=5 // pred_fallthru
      _
  $region6: #{basic_block_forward.3} parent=0 // loop_footer
    %s15 = sadd.s32 1, %s11
  $region7: #{basic_block_forward.3} parent=0 // loop_footer_branch
    %10 = sbr.rel target = $region3
  $region8: #{basic_block_forward.3} parent=0 // loop_exit
    _

</llo_original>
